<compile_context>
chip_gen: v5e
topology: v5e:2x2
jax: 0.10.0
libtpu: 0.0.40
codegen_flags: <defaults>
</compile_context>

<pallas_src>
import functools

import jax
import jax.numpy as jnp
from jax.experimental import pallas as pl
from jax.experimental.pallas import tpu as pltpu


_VMEM_SPEC = pl.BlockSpec(memory_space=pltpu.MemorySpace.VMEM)


# ------------------------------ fused kernel ------------------------------- #

def _fused_lenet_kernel(xw_ref, g1_ref, g2_ref, s1e_ref, s1o_ref, s2e_ref,
                        s2o_ref, u_ref, m1_ref, wf_ref, bias_ref, o_ref, *,
                        batch):
    f32 = jnp.float32
    bf16 = jnp.bfloat16
    m2_rows = 16 * batch                       # packed conv2 output rows

    b1 = bias_ref[0:1, :]                      # (1,256) conv1 bias per (dj, c, wo)
    b2 = bias_ref[1:2, :]                      # (1,256) conv2 bias per (dj, c2, wo2)
    bf1 = bias_ref[2:3, 0:128]
    bf2 = bias_ref[3:4, 0:128]
    bf3 = bias_ref[4:5, 0:128]
    bf4 = bias_ref[5:6, 0:128]

    # ---- conv1 + bias + ReLU: ONE im2row matmul over the packed batch slab ----
    y = jnp.dot(xw_ref[...], g1_ref[...], preferred_element_type=f32)   # (32B,256)
    y = jnp.maximum(y + b1, 0.0)
    # 2x2/2 max-pool: width pair via lane halves, height pair via 0/1 compaction.
    y = jnp.maximum(y[:, 0:128], y[:, 128:256])                          # (32B,128)
    p1 = jnp.maximum(
        jnp.dot(s1e_ref[...], y, preferred_element_type=f32),
        jnp.dot(s1o_ref[...], y, preferred_element_type=f32))            # (16B+8,128)

    # ---- conv2 + bias + ReLU: 5 kernel-row-offset matmuls, then max-pool ----
    z = None
    for i in range(5):
        lhs = p1[i:i + m2_rows, :].astype(bf16)                          # (16B,128)
        t = jnp.dot(lhs, g2_ref[i], preferred_element_type=f32)          # (16B,256)
        z = t if z is None else z + t
    z = jnp.maximum(z + b2, 0.0)
    z = jnp.maximum(z[:, 0:128], z[:, 128:256])                          # (16B,128)
    p2 = jnp.maximum(
        jnp.dot(s2e_ref[...], z, preferred_element_type=f32),
        jnp.dot(s2o_ref[...], z, preferred_element_type=f32))            # (8B,128)

    # ---- fc1: NCHW flatten folded, 4 h-blocks merged along N=512 ----
    q = jnp.dot(p2.astype(bf16), m1_ref[...], preferred_element_type=f32)  # (8B,512)
    r = q[:, 0:128]
    for h in range(1, 4):
        r = r + jnp.dot(u_ref[h - 1], q[:, 128 * h:128 * (h + 1)],
                        preferred_element_type=f32)
    a = jnp.maximum(r + bf1, 0.0)                                        # fc1 + ReLU
    a = jnp.maximum(
        jnp.dot(a.astype(bf16), wf_ref[0], preferred_element_type=f32) + bf2,
        0.0)                                                             # fc2 + ReLU
    a = jnp.dot(a.astype(bf16), wf_ref[1], preferred_element_type=f32) + bf3  # fc3
    a = jnp.dot(a.astype(bf16), wf_ref[2], preferred_element_type=f32) + bf4  # fc4
    o_ref[...] = a                     # (8B,128) lane-dense, unmasked full store


# --------------------------- one-time weight prep --------------------------- #

def prepare_params(params, batch, num_classes=2):
    """Lower the PyTorch-layout weights once into padded, lane-dense matrices."""
    f32 = jnp.float32
    bf16 = jnp.bfloat16
    B = batch
    w1, b1 = params["conv1"]          # (6,1,5,5), (6,)
    w2, b2 = params["conv2"]          # (16,6,5,5), (16,)
    fw1, fb1 = params["fc1"]          # (120,256)
    fw2, fb2 = params["fc2"]          # (84,120)
    fw3, fb3 = params["fc3"]          # (50,84)
    fw4, fb4 = params["fc4"]          # (nc,50)

    # conv1 -> single (256,256) im2row matrix.  Row (i*32 + jin), col
    # (dj*128 + c*12 + wo) holds w1[c,0,i,j] with jin = 2*wo + dj + j.
    c = jnp.arange(6)[:, None, None]
    wo = jnp.arange(12)[None, :, None]
    j = jnp.arange(5)[None, None, :]
    g1 = jnp.zeros((256, 256), f32)
    for i in range(5):
        vals = jnp.broadcast_to(w1[:, 0, i, :][:, None, :], (6, 12, 5)).reshape(-1)
        for dj in range(2):
            rows = jnp.broadcast_to(i * 32 + 2 * wo + dj + j, (6, 12, 5)).reshape(-1)
            cols = jnp.broadcast_to(dj * 128 + c * 12 + wo, (6, 12, 5)).reshape(-1)
            g1 = g1.at[rows, cols].set(vals)

    # conv2 -> five (128,256) matrices (one per kernel row offset).  Row
    # (ci*12 + 2*wo2 + dj + j), col (dj*128 + c2*4 + wo2) holds w2[c2,ci,i,j].
    c2 = jnp.arange(16)[:, None, None, None]
    ci = jnp.arange(6)[None, :, None, None]
    wo2 = jnp.arange(4)[None, None, :, None]
    j2 = jnp.arange(5)[None, None, None, :]
    g2 = []
    for i in range(5):
        vals = jnp.broadcast_to(w2[:, :, i, :][:, :, None, :], (16, 6, 4, 5)).reshape(-1)
        m = jnp.zeros((128, 256), f32)
        for dj in range(2):
            rows = jnp.broadcast_to(ci * 12 + 2 * wo2 + dj + j2, (16, 6, 4, 5)).reshape(-1)
            cols = jnp.broadcast_to(dj * 128 + c2 * 4 + wo2, (16, 6, 4, 5)).reshape(-1)
            m = m.at[rows, cols].set(vals)
        g2.append(m)
    g2 = jnp.stack(g2)

    # 0/1 stride-2 row compaction matrices for the two max-pools (exact, f32).
    bi = jnp.arange(B)[:, None]
    ho = jnp.arange(12)[None, :]
    r1 = (bi * 16 + ho).reshape(-1)
    c1e = (bi * 32 + 2 * ho).reshape(-1)
    s1e = jnp.zeros((16 * B + 8, 32 * B), f32).at[r1, c1e].set(1.0)
    s1o = jnp.zeros((16 * B + 8, 32 * B), f32).at[r1, c1e + 1].set(1.0)

    hh = jnp.arange(4)[None, :]
    r2 = (bi * 8 + hh).reshape(-1)
    c2e = (bi * 16 + 2 * hh).reshape(-1)
    s2e = jnp.zeros((8 * B, 16 * B), f32).at[r2, c2e].set(1.0)
    s2o = jnp.zeros((8 * B, 16 * B), f32).at[r2, c2e + 1].set(1.0)

    # fc1 h-block alignment selections: u[h-1][bi*8, bi*8+h] = 1 (h = 1..3).
    u = []
    base = jnp.arange(B) * 8
    for h in range(1, 4):
        u.append(jnp.zeros((8 * B, 8 * B), f32).at[base, base + h].set(1.0))
    u = jnp.stack(u)

    # fc1 with NCHW flatten folded: (128, 512), one 128-wide N block per pooled row h.
    fw1_r = fw1.reshape(120, 16, 4, 4)                     # (n, c2, h, w)
    m1 = jnp.concatenate(
        [jnp.zeros((128, 128), f32).at[:64, :120].set(
            fw1_r[:, :, h, :].reshape(120, 64).T) for h in range(4)], axis=1)

    def pad_mat(w_t):
        k, n = w_t.shape
        return jnp.zeros((128, 128), f32).at[:k, :n].set(w_t)
    wf = jnp.stack([pad_mat(fw2.T), pad_mat(fw3.T), pad_mat(fw4.T)])

    bias = jnp.zeros((8, 256), f32)
    b1m = jnp.repeat(b1, 12)                               # per (c, wo) column
    bias = bias.at[0, 0:72].set(b1m).at[0, 128:200].set(b1m)
    b2m = jnp.repeat(b2, 4)                                # per (c2, wo2) column
    bias = bias.at[1, 0:64].set(b2m).at[1, 128:192].set(b2m)
    bias = bias.at[2, 0:120].set(fb1)
    bias = bias.at[3, 0:84].set(fb2)
    bias = bias.at[4, 0:50].set(fb3)
    bias = bias.at[5, 0:num_classes].set(fb4)

    return {"g1": g1.astype(bf16), "g2": g2.astype(bf16),
            "s1e": s1e, "s1o": s1o, "s2e": s2e, "s2o": s2o, "u": u,
            "m1": m1.astype(bf16), "wf": wf.astype(bf16), "bias": bias}


# ------------------------------ forward wrapper ----------------------------- #

def model2_forward(prepared, x_nchw, num_classes=2):
    B = x_nchw.shape[0]
    assert x_nchw.shape[1:] == (1, 28, 28), x_nchw.shape
    assert prepared["s2e"].shape == (8 * B, 16 * B), "prepared params built for a different batch"

    # Host-side layout plumbing (no FLOPs): im2row over the 5 kernel rows, width
    # padded to 32, images packed into 32-row slabs -> (B*32, 256) bf16.
    x2 = x_nchw.reshape(B, 28, 28)
    xp = jnp.pad(x2, ((0, 0), (0, 8), (0, 4)))                           # (B,36,32)
    xw = jnp.concatenate([xp[:, i:i + 32, :] for i in range(5)], axis=-1)  # (B,32,160)
    xw = jnp.pad(xw, ((0, 0), (0, 0), (0, 96)))                          # (B,32,256)
    xw = xw.reshape(B * 32, 256).astype(jnp.bfloat16)

    args = (xw, prepared["g1"], prepared["g2"], prepared["s1e"], prepared["s1o"],
            prepared["s2e"], prepared["s2o"], prepared["u"], prepared["m1"],
            prepared["wf"], prepared["bias"])

    flops = 2 * ((32 * B) * 256 * 256
                 + 2 * (16 * B + 8) * (32 * B) * 128
                 + 5 * (16 * B) * 128 * 256
                 + 2 * (8 * B) * (16 * B) * 128
                 + (8 * B) * 128 * 512
                 + 3 * (8 * B) * (8 * B) * 128
                 + 3 * (8 * B) * 128 * 128)
    bytes_accessed = sum(int(a.size) * a.dtype.itemsize for a in args) + 8 * B * 128 * 4

    kernel = functools.partial(_fused_lenet_kernel, batch=B)
    out = pl.pallas_call(
        kernel,
        out_shape=jax.ShapeDtypeStruct((8 * B, 128), jnp.float32),
        in_specs=[_VMEM_SPEC] * len(args),
        out_specs=_VMEM_SPEC,
        cost_estimate=pl.CostEstimate(flops=flops, transcendentals=0,
                                      bytes_accessed=bytes_accessed),
    )(*args)
    # Valid logits live at rows bi*8, lanes [0:num_classes].
    return out[0::8, :num_classes]


# ----------------------------- params / reference --------------------------- #

def init_params(key, num_classes=2):
    def lin_init(key, out_f, in_f):
        kw_, kb_ = jax.random.split(key)
        bound = 1.0 / jnp.sqrt(in_f)
        w = jax.random.uniform(kw_, (out_f, in_f), jnp.float32, -bound, bound)
        b = jax.random.uniform(kb_, (out_f,), jnp.float32, -bound, bound)
        return w, b

    def conv_init(key, cout, cin, k):
        kw_, kb_ = jax.random.split(key)
        fan_in = cin * k * k
        bound = 1.0 / jnp.sqrt(fan_in)
        w = jax.random.uniform(kw_, (cout, cin, k, k), jnp.float32, -bound, bound)
        b = jax.random.uniform(kb_, (cout,), jnp.float32, -bound, bound)
        return w, b

    ks = jax.random.split(key, 6)
    return {
        "conv1": conv_init(ks[0], 6, 1, 5),
        "conv2": conv_init(ks[1], 16, 6, 5),
        "fc1": lin_init(ks[2], 120, 256),
        "fc2": lin_init(ks[3], 84, 120),
        "fc3": lin_init(ks[4], 50, 84),
        "fc4": lin_init(ks[5], num_classes, 50),
    }


def _reference_forward(params, x_nchw):
    hp = jax.lax.Precision.HIGHEST

    def conv(x, w, b):
        y = jax.lax.conv_general_dilated(x, w, (1, 1), "VALID",
                                         dimension_numbers=("NCHW", "OIHW", "NCHW"),
                                         precision=hp)
        return jax.nn.relu(y + b[None, :, None, None])

    def pool(x):
        return jax.lax.reduce_window(x, -jnp.inf, jax.lax.max,
                                     (1, 1, 2, 2), (1, 1, 2, 2), "VALID")

    x = pool(conv(x_nchw, *params["conv1"]))
    x = pool(conv(x, *params["conv2"]))
    x = x.reshape(x.shape[0], -1)
    w, b = params["fc1"]; x = jax.nn.relu(jnp.dot(x, w.T, precision=hp) + b)
    w, b = params["fc2"]; x = jax.nn.relu(jnp.dot(x, w.T, precision=hp) + b)
    w, b = params["fc3"]; x = jnp.dot(x, w.T, precision=hp) + b
    w, b = params["fc4"]; x = jnp.dot(x, w.T, precision=hp) + b
    return x


if __name__ == "__main__":
    key = jax.random.PRNGKey(0)
    k_params, k_input = jax.random.split(key)
    num_classes = 2
    batch = 2

    params = init_params(k_params, num_classes=num_classes)
    x = jax.random.normal(k_input, (batch, 1, 28, 28), dtype=jnp.float32)

    prepared = prepare_params(params, batch=batch, num_classes=num_classes)

    fwd = jax.jit(functools.partial(model2_forward, num_classes=num_classes))
    out = fwd(prepared, x)
    jax.block_until_ready(out)

    assert out.shape == (batch, num_classes), out.shape
    ref = _reference_forward(params, x)
    # bf16 weights / matmul inputs (f32 accumulation) vs f32 HIGHEST reference.
    assert jnp.allclose(out, ref, rtol=2e-2, atol=2e-2), (out, ref)

    print("KERNEL_OK")
</pallas_src>

<mosaic_0001>
module attributes {stable_mosaic.version = 11 : i64} {
  func.func @_fused_lenet_kernel(%arg0: memref<64x256xbf16, #tpu.memory_space<vmem>>, %arg1: memref<256x256xbf16, #tpu.memory_space<vmem>>, %arg2: memref<5x128x256xbf16, #tpu.memory_space<vmem>>, %arg3: memref<40x64xf32, #tpu.memory_space<vmem>>, %arg4: memref<40x64xf32, #tpu.memory_space<vmem>>, %arg5: memref<16x32xf32, #tpu.memory_space<vmem>>, %arg6: memref<16x32xf32, #tpu.memory_space<vmem>>, %arg7: memref<3x16x16xf32, #tpu.memory_space<vmem>>, %arg8: memref<128x512xbf16, #tpu.memory_space<vmem>>, %arg9: memref<3x128x128xbf16, #tpu.memory_space<vmem>>, %arg10: memref<8x256xf32, #tpu.memory_space<vmem>>, %arg11: memref<16x128xf32, #tpu.memory_space<vmem>>) attributes {dimension_semantics = [], scalar_prefetch = 0 : i64, scratch_operands = 0 : i64, tpu.core_type = #tpu.core_type<tc>} {
    %c0 = arith.constant 0 : index
    %c0_0 = arith.constant 0 : index
    %0 = vector.load %arg10[%c0, %c0_0] : memref<8x256xf32, #tpu.memory_space<vmem>>, vector<1x256xf32>
    %c1 = arith.constant 1 : index
    %c0_1 = arith.constant 0 : index
    %1 = vector.load %arg10[%c1, %c0_1] : memref<8x256xf32, #tpu.memory_space<vmem>>, vector<1x256xf32>
    %c2 = arith.constant 2 : index
    %c0_2 = arith.constant 0 : index
    %2 = vector.load %arg10[%c2, %c0_2] : memref<8x256xf32, #tpu.memory_space<vmem>>, vector<1x128xf32>
    %c3 = arith.constant 3 : index
    %c0_3 = arith.constant 0 : index
    %3 = vector.load %arg10[%c3, %c0_3] : memref<8x256xf32, #tpu.memory_space<vmem>>, vector<1x128xf32>
    %c4 = arith.constant 4 : index
    %c0_4 = arith.constant 0 : index
    %4 = vector.load %arg10[%c4, %c0_4] : memref<8x256xf32, #tpu.memory_space<vmem>>, vector<1x128xf32>
    %c5 = arith.constant 5 : index
    %c0_5 = arith.constant 0 : index
    %5 = vector.load %arg10[%c5, %c0_5] : memref<8x256xf32, #tpu.memory_space<vmem>>, vector<1x128xf32>
    %c0_6 = arith.constant 0 : index
    %c0_7 = arith.constant 0 : index
    %6 = vector.load %arg0[%c0_6, %c0_7] : memref<64x256xbf16, #tpu.memory_space<vmem>>, vector<64x256xbf16>
    %c0_8 = arith.constant 0 : index
    %c0_9 = arith.constant 0 : index
    %7 = vector.load %arg1[%c0_8, %c0_9] : memref<256x256xbf16, #tpu.memory_space<vmem>>, vector<256x256xbf16>
    %cst = arith.constant dense<0.000000e+00> : vector<64x256xf32>
    %8 = tpu.matmul %6, %7, %cst {dimension_numbers = #tpu.dot_dimension_numbers<[1], [0], [0], [1], [0, 0, 1, 1], [], []>} : vector<64x256xbf16>, vector<256x256xbf16>, vector<64x256xf32> -> vector<64x256xf32>
    %9 = vector.broadcast %0 : vector<1x256xf32> to vector<64x256xf32>
    %10 = arith.addf %8, %9 : vector<64x256xf32>
    %cst_10 = arith.constant 0.000000e+00 : f32
    %11 = vector.broadcast %cst_10 : f32 to vector<64x256xf32>
    %12 = arith.maximumf %10, %11 : vector<64x256xf32>
    %13 = vector.extract_strided_slice %12 {offsets = [0, 0], sizes = [64, 128], strides = [1, 1]} : vector<64x256xf32> to vector<64x128xf32>
    %14 = vector.extract_strided_slice %12 {offsets = [0, 128], sizes = [64, 128], strides = [1, 1]} : vector<64x256xf32> to vector<64x128xf32>
    %15 = arith.maximumf %13, %14 : vector<64x128xf32>
    %c0_11 = arith.constant 0 : index
    %c0_12 = arith.constant 0 : index
    %16 = vector.load %arg3[%c0_11, %c0_12] : memref<40x64xf32, #tpu.memory_space<vmem>>, vector<40x64xf32>
    %cst_13 = arith.constant dense<0.000000e+00> : vector<40x128xf32>
    %17 = tpu.matmul %16, %15, %cst_13 {dimension_numbers = #tpu.dot_dimension_numbers<[1], [0], [0], [1], [0, 0, 1, 1], [], []>} : vector<40x64xf32>, vector<64x128xf32>, vector<40x128xf32> -> vector<40x128xf32>
    %c0_14 = arith.constant 0 : index
    %c0_15 = arith.constant 0 : index
    %18 = vector.load %arg4[%c0_14, %c0_15] : memref<40x64xf32, #tpu.memory_space<vmem>>, vector<40x64xf32>
    %cst_16 = arith.constant dense<0.000000e+00> : vector<40x128xf32>
    %19 = tpu.matmul %18, %15, %cst_16 {dimension_numbers = #tpu.dot_dimension_numbers<[1], [0], [0], [1], [0, 0, 1, 1], [], []>} : vector<40x64xf32>, vector<64x128xf32>, vector<40x128xf32> -> vector<40x128xf32>
    %20 = arith.maximumf %17, %19 : vector<40x128xf32>
    %21 = vector.extract_strided_slice %20 {offsets = [0, 0], sizes = [32, 128], strides = [1, 1]} : vector<40x128xf32> to vector<32x128xf32>
    %22 = arith.truncf %21 : vector<32x128xf32> to vector<32x128xbf16>
    %c0_17 = arith.constant 0 : index
    %c0_18 = arith.constant 0 : index
    %c0_19 = arith.constant 0 : index
    %23 = vector.load %arg2[%c0_17, %c0_18, %c0_19] : memref<5x128x256xbf16, #tpu.memory_space<vmem>>, vector<1x128x256xbf16>
    %24 = vector.shape_cast %23 : vector<1x128x256xbf16> to vector<128x256xbf16>
    %cst_20 = arith.constant dense<0.000000e+00> : vector<32x256xf32>
    %25 = tpu.matmul %22, %24, %cst_20 {dimension_numbers = #tpu.dot_dimension_numbers<[1], [0], [0], [1], [0, 0, 1, 1], [], []>} : vector<32x128xbf16>, vector<128x256xbf16>, vector<32x256xf32> -> vector<32x256xf32>
    %26 = vector.extract_strided_slice %20 {offsets = [1, 0], sizes = [32, 128], strides = [1, 1]} : vector<40x128xf32> to vector<32x128xf32>
    %27 = arith.truncf %26 : vector<32x128xf32> to vector<32x128xbf16>
    %c1_21 = arith.constant 1 : index
    %c0_22 = arith.constant 0 : index
    %c0_23 = arith.constant 0 : index
    %28 = vector.load %arg2[%c1_21, %c0_22, %c0_23] : memref<5x128x256xbf16, #tpu.memory_space<vmem>>, vector<1x128x256xbf16>
    %29 = vector.shape_cast %28 : vector<1x128x256xbf16> to vector<128x256xbf16>
    %cst_24 = arith.constant dense<0.000000e+00> : vector<32x256xf32>
    %30 = tpu.matmul %27, %29, %cst_24 {dimension_numbers = #tpu.dot_dimension_numbers<[1], [0], [0], [1], [0, 0, 1, 1], [], []>} : vector<32x128xbf16>, vector<128x256xbf16>, vector<32x256xf32> -> vector<32x256xf32>
    %31 = arith.addf %25, %30 : vector<32x256xf32>
    %32 = vector.extract_strided_slice %20 {offsets = [2, 0], sizes = [32, 128], strides = [1, 1]} : vector<40x128xf32> to vector<32x128xf32>
    %33 = arith.truncf %32 : vector<32x128xf32> to vector<32x128xbf16>
    %c2_25 = arith.constant 2 : index
    %c0_26 = arith.constant 0 : index
    %c0_27 = arith.constant 0 : index
    %34 = vector.load %arg2[%c2_25, %c0_26, %c0_27] : memref<5x128x256xbf16, #tpu.memory_space<vmem>>, vector<1x128x256xbf16>
    %35 = vector.shape_cast %34 : vector<1x128x256xbf16> to vector<128x256xbf16>
    %cst_28 = arith.constant dense<0.000000e+00> : vector<32x256xf32>
    %36 = tpu.matmul %33, %35, %cst_28 {dimension_numbers = #tpu.dot_dimension_numbers<[1], [0], [0], [1], [0, 0, 1, 1], [], []>} : vector<32x128xbf16>, vector<128x256xbf16>, vector<32x256xf32> -> vector<32x256xf32>
    %37 = arith.addf %31, %36 : vector<32x256xf32>
    %38 = vector.extract_strided_slice %20 {offsets = [3, 0], sizes = [32, 128], strides = [1, 1]} : vector<40x128xf32> to vector<32x128xf32>
    %39 = arith.truncf %38 : vector<32x128xf32> to vector<32x128xbf16>
    %c3_29 = arith.constant 3 : index
    %c0_30 = arith.constant 0 : index
    %c0_31 = arith.constant 0 : index
    %40 = vector.load %arg2[%c3_29, %c0_30, %c0_31] : memref<5x128x256xbf16, #tpu.memory_space<vmem>>, vector<1x128x256xbf16>
    %41 = vector.shape_cast %40 : vector<1x128x256xbf16> to vector<128x256xbf16>
    %cst_32 = arith.constant dense<0.000000e+00> : vector<32x256xf32>
    %42 = tpu.matmul %39, %41, %cst_32 {dimension_numbers = #tpu.dot_dimension_numbers<[1], [0], [0], [1], [0, 0, 1, 1], [], []>} : vector<32x128xbf16>, vector<128x256xbf16>, vector<32x256xf32> -> vector<32x256xf32>
    %43 = arith.addf %37, %42 : vector<32x256xf32>
    %44 = vector.extract_strided_slice %20 {offsets = [4, 0], sizes = [32, 128], strides = [1, 1]} : vector<40x128xf32> to vector<32x128xf32>
    %45 = arith.truncf %44 : vector<32x128xf32> to vector<32x128xbf16>
    %c4_33 = arith.constant 4 : index
    %c0_34 = arith.constant 0 : index
    %c0_35 = arith.constant 0 : index
    %46 = vector.load %arg2[%c4_33, %c0_34, %c0_35] : memref<5x128x256xbf16, #tpu.memory_space<vmem>>, vector<1x128x256xbf16>
    %47 = vector.shape_cast %46 : vector<1x128x256xbf16> to vector<128x256xbf16>
    %cst_36 = arith.constant dense<0.000000e+00> : vector<32x256xf32>
    %48 = tpu.matmul %45, %47, %cst_36 {dimension_numbers = #tpu.dot_dimension_numbers<[1], [0], [0], [1], [0, 0, 1, 1], [], []>} : vector<32x128xbf16>, vector<128x256xbf16>, vector<32x256xf32> -> vector<32x256xf32>
    %49 = arith.addf %43, %48 : vector<32x256xf32>
    %50 = vector.broadcast %1 : vector<1x256xf32> to vector<32x256xf32>
    %51 = arith.addf %49, %50 : vector<32x256xf32>
    %cst_37 = arith.constant 0.000000e+00 : f32
    %52 = vector.broadcast %cst_37 : f32 to vector<32x256xf32>
    %53 = arith.maximumf %51, %52 : vector<32x256xf32>
    %54 = vector.extract_strided_slice %53 {offsets = [0, 0], sizes = [32, 128], strides = [1, 1]} : vector<32x256xf32> to vector<32x128xf32>
    %55 = vector.extract_strided_slice %53 {offsets = [0, 128], sizes = [32, 128], strides = [1, 1]} : vector<32x256xf32> to vector<32x128xf32>
    %56 = arith.maximumf %54, %55 : vector<32x128xf32>
    %c0_38 = arith.constant 0 : index
    %c0_39 = arith.constant 0 : index
    %57 = vector.load %arg5[%c0_38, %c0_39] : memref<16x32xf32, #tpu.memory_space<vmem>>, vector<16x32xf32>
    %cst_40 = arith.constant dense<0.000000e+00> : vector<16x128xf32>
    %58 = tpu.matmul %57, %56, %cst_40 {dimension_numbers = #tpu.dot_dimension_numbers<[1], [0], [0], [1], [0, 0, 1, 1], [], []>} : vector<16x32xf32>, vector<32x128xf32>, vector<16x128xf32> -> vector<16x128xf32>
    %c0_41 = arith.constant 0 : index
    %c0_42 = arith.constant 0 : index
    %59 = vector.load %arg6[%c0_41, %c0_42] : memref<16x32xf32, #tpu.memory_space<vmem>>, vector<16x32xf32>
    %cst_43 = arith.constant dense<0.000000e+00> : vector<16x128xf32>
    %60 = tpu.matmul %59, %56, %cst_43 {dimension_numbers = #tpu.dot_dimension_numbers<[1], [0], [0], [1], [0, 0, 1, 1], [], []>} : vector<16x32xf32>, vector<32x128xf32>, vector<16x128xf32> -> vector<16x128xf32>
    %61 = arith.maximumf %58, %60 : vector<16x128xf32>
    %62 = arith.truncf %61 : vector<16x128xf32> to vector<16x128xbf16>
    %c0_44 = arith.constant 0 : index
    %c0_45 = arith.constant 0 : index
    %63 = vector.load %arg8[%c0_44, %c0_45] : memref<128x512xbf16, #tpu.memory_space<vmem>>, vector<128x512xbf16>
    %cst_46 = arith.constant dense<0.000000e+00> : vector<16x512xf32>
    %64 = tpu.matmul %62, %63, %cst_46 {dimension_numbers = #tpu.dot_dimension_numbers<[1], [0], [0], [1], [0, 0, 1, 1], [], []>} : vector<16x128xbf16>, vector<128x512xbf16>, vector<16x512xf32> -> vector<16x512xf32>
    %65 = vector.extract_strided_slice %64 {offsets = [0, 0], sizes = [16, 128], strides = [1, 1]} : vector<16x512xf32> to vector<16x128xf32>
    %c0_47 = arith.constant 0 : index
    %c0_48 = arith.constant 0 : index
    %c0_49 = arith.constant 0 : index
    %66 = vector.load %arg7[%c0_47, %c0_48, %c0_49] : memref<3x16x16xf32, #tpu.memory_space<vmem>>, vector<1x16x16xf32>
    %67 = vector.shape_cast %66 : vector<1x16x16xf32> to vector<16x16xf32>
    %68 = vector.extract_strided_slice %64 {offsets = [0, 128], sizes = [16, 128], strides = [1, 1]} : vector<16x512xf32> to vector<16x128xf32>
    %cst_50 = arith.constant dense<0.000000e+00> : vector<16x128xf32>
    %69 = tpu.matmul %67, %68, %cst_50 {dimension_numbers = #tpu.dot_dimension_numbers<[1], [0], [0], [1], [0, 0, 1, 1], [], []>} : vector<16x16xf32>, vector<16x128xf32>, vector<16x128xf32> -> vector<16x128xf32>
    %70 = arith.addf %65, %69 : vector<16x128xf32>
    %c1_51 = arith.constant 1 : index
    %c0_52 = arith.constant 0 : index
    %c0_53 = arith.constant 0 : index
    %71 = vector.load %arg7[%c1_51, %c0_52, %c0_53] : memref<3x16x16xf32, #tpu.memory_space<vmem>>, vector<1x16x16xf32>
    %72 = vector.shape_cast %71 : vector<1x16x16xf32> to vector<16x16xf32>
    %73 = vector.extract_strided_slice %64 {offsets = [0, 256], sizes = [16, 128], strides = [1, 1]} : vector<16x512xf32> to vector<16x128xf32>
    %cst_54 = arith.constant dense<0.000000e+00> : vector<16x128xf32>
    %74 = tpu.matmul %72, %73, %cst_54 {dimension_numbers = #tpu.dot_dimension_numbers<[1], [0], [0], [1], [0, 0, 1, 1], [], []>} : vector<16x16xf32>, vector<16x128xf32>, vector<16x128xf32> -> vector<16x128xf32>
    %75 = arith.addf %70, %74 : vector<16x128xf32>
    %c2_55 = arith.constant 2 : index
    %c0_56 = arith.constant 0 : index
    %c0_57 = arith.constant 0 : index
    %76 = vector.load %arg7[%c2_55, %c0_56, %c0_57] : memref<3x16x16xf32, #tpu.memory_space<vmem>>, vector<1x16x16xf32>
    %77 = vector.shape_cast %76 : vector<1x16x16xf32> to vector<16x16xf32>
    %78 = vector.extract_strided_slice %64 {offsets = [0, 384], sizes = [16, 128], strides = [1, 1]} : vector<16x512xf32> to vector<16x128xf32>
    %cst_58 = arith.constant dense<0.000000e+00> : vector<16x128xf32>
    %79 = tpu.matmul %77, %78, %cst_58 {dimension_numbers = #tpu.dot_dimension_numbers<[1], [0], [0], [1], [0, 0, 1, 1], [], []>} : vector<16x16xf32>, vector<16x128xf32>, vector<16x128xf32> -> vector<16x128xf32>
    %80 = arith.addf %75, %79 : vector<16x128xf32>
    %81 = vector.broadcast %2 : vector<1x128xf32> to vector<16x128xf32>
    %82 = arith.addf %80, %81 : vector<16x128xf32>
    %cst_59 = arith.constant 0.000000e+00 : f32
    %83 = vector.broadcast %cst_59 : f32 to vector<16x128xf32>
    %84 = arith.maximumf %82, %83 : vector<16x128xf32>
    %85 = arith.truncf %84 : vector<16x128xf32> to vector<16x128xbf16>
    %c0_60 = arith.constant 0 : index
    %c0_61 = arith.constant 0 : index
    %c0_62 = arith.constant 0 : index
    %86 = vector.load %arg9[%c0_60, %c0_61, %c0_62] : memref<3x128x128xbf16, #tpu.memory_space<vmem>>, vector<1x128x128xbf16>
    %87 = vector.shape_cast %86 : vector<1x128x128xbf16> to vector<128x128xbf16>
    %cst_63 = arith.constant dense<0.000000e+00> : vector<16x128xf32>
    %88 = tpu.matmul %85, %87, %cst_63 {dimension_numbers = #tpu.dot_dimension_numbers<[1], [0], [0], [1], [0, 0, 1, 1], [], []>} : vector<16x128xbf16>, vector<128x128xbf16>, vector<16x128xf32> -> vector<16x128xf32>
    %89 = vector.broadcast %3 : vector<1x128xf32> to vector<16x128xf32>
    %90 = arith.addf %88, %89 : vector<16x128xf32>
    %cst_64 = arith.constant 0.000000e+00 : f32
    %91 = vector.broadcast %cst_64 : f32 to vector<16x128xf32>
    %92 = arith.maximumf %90, %91 : vector<16x128xf32>
    %93 = arith.truncf %92 : vector<16x128xf32> to vector<16x128xbf16>
    %c1_65 = arith.constant 1 : index
    %c0_66 = arith.constant 0 : index
    %c0_67 = arith.constant 0 : index
    %94 = vector.load %arg9[%c1_65, %c0_66, %c0_67] : memref<3x128x128xbf16, #tpu.memory_space<vmem>>, vector<1x128x128xbf16>
    %95 = vector.shape_cast %94 : vector<1x128x128xbf16> to vector<128x128xbf16>
    %cst_68 = arith.constant dense<0.000000e+00> : vector<16x128xf32>
    %96 = tpu.matmul %93, %95, %cst_68 {dimension_numbers = #tpu.dot_dimension_numbers<[1], [0], [0], [1], [0, 0, 1, 1], [], []>} : vector<16x128xbf16>, vector<128x128xbf16>, vector<16x128xf32> -> vector<16x128xf32>
    %97 = vector.broadcast %4 : vector<1x128xf32> to vector<16x128xf32>
    %98 = arith.addf %96, %97 : vector<16x128xf32>
    %99 = arith.truncf %98 : vector<16x128xf32> to vector<16x128xbf16>
    %c2_69 = arith.constant 2 : index
    %c0_70 = arith.constant 0 : index
    %c0_71 = arith.constant 0 : index
    %100 = vector.load %arg9[%c2_69, %c0_70, %c0_71] : memref<3x128x128xbf16, #tpu.memory_space<vmem>>, vector<1x128x128xbf16>
    %101 = vector.shape_cast %100 : vector<1x128x128xbf16> to vector<128x128xbf16>
    %cst_72 = arith.constant dense<0.000000e+00> : vector<16x128xf32>
    %102 = tpu.matmul %99, %101, %cst_72 {dimension_numbers = #tpu.dot_dimension_numbers<[1], [0], [0], [1], [0, 0, 1, 1], [], []>} : vector<16x128xbf16>, vector<128x128xbf16>, vector<16x128xf32> -> vector<16x128xf32>
    %103 = vector.broadcast %5 : vector<1x128xf32> to vector<16x128xf32>
    %104 = arith.addf %102, %103 : vector<16x128xf32>
    %c0_73 = arith.constant 0 : index
    %c0_74 = arith.constant 0 : index
    %105 = vector.load %arg11[%c0_73, %c0_74] : memref<16x128xf32, #tpu.memory_space<vmem>>, vector<16x128xf32>
    tpu.vector_store %arg11[%c0_73, %c0_74], %104 {strides = array<i32>} : memref<16x128xf32, #tpu.memory_space<vmem>>, vector<16x128xf32>,
    return
  }
}

</mosaic_0001>

<llo_original>
// kernel: model2_forward.1
$region0: #{model2_forward.1}
  #allocation0 [shape = 'u32[]', space=smem, size = 0x4, offset = 0x4, fixed_abs, tag = 'smem constant byte address 0x4 - core index']
  #allocation1 [shape = 'u32[72,128]{1,0:T(1,128)}', space=vmem, size = 0x9000, scoped, tag = 'internal scratch']
  %s0 = inlined_call_operand.vmem [shape: bf16[64,256], index: 0, kind: input, shape index: {}]
  %s1 = inlined_call_operand.vmem [shape: bf16[256,256], index: 1, kind: input, shape index: {}]
  %s2 = inlined_call_operand.vmem [shape: bf16[5,128,256], index: 2, kind: input, shape index: {}]
  %s3 = inlined_call_operand.hbm [shape: f32[40,64], index: 3, kind: input, shape index: {}]
  %s4 = inlined_call_operand.hbm [shape: f32[40,64], index: 4, kind: input, shape index: {}]
  %s5 = inlined_call_operand.hbm [shape: f32[16,32], index: 5, kind: input, shape index: {}]
  %s6 = inlined_call_operand.hbm [shape: f32[16,32], index: 6, kind: input, shape index: {}]
  %s7 = inlined_call_operand.vmem [shape: f32[3,16,16], index: 7, kind: input, shape index: {}]
  %s8 = inlined_call_operand.hbm [shape: bf16[128,512], index: 8, kind: input, shape index: {}]
  %s9 = inlined_call_operand.hbm [shape: bf16[3,128,128], index: 9, kind: input, shape index: {}]
  %s10 = inlined_call_operand.hbm [shape: f32[8,256], index: 10, kind: input, shape index: {}]
  %s11 = inlined_call_operand.vmem [shape: f32[16,128], index: 11, kind: output, shape index: {}]
  %s12 = sld [smem:[#allocation0]]
  $region82: #{model2_forward.1} parent=0
    _
  %s14 = ssub.s32 1, %s12
  %s15 = scalar_select 0, %s14, %s12
  $region1: #{model2_forward.1} parent=0
    #allocation2 [shape = 'u8[20480]{0}', space=vmem, size = 0x5000, scoped, tag = 'input window, operand 3, single buffered']
    #allocation3 [shape = 's32[1]{0}', space=sflag, size = 0x4, scoped, tag = 'scoped memory for model2_forward.1']
    #allocation4 [shape = 'u8[20480]{0}', space=vmem, size = 0x5000, scoped, tag = 'input window, operand 4, single buffered']
    #allocation5 [shape = 's32[1]{0}', space=sflag, size = 0x4, scoped, tag = 'scoped memory for model2_forward.1']
    #allocation6 [shape = 'u8[8192]{0}', space=vmem, size = 0x2000, scoped, tag = 'input window, operand 5, single buffered']
    #allocation7 [shape = 'u8[8192]{0}', space=vmem, size = 0x2000, scoped, tag = 'input window, operand 6, single buffered']
    #allocation8 [shape = 's32[1]{0}', space=sflag, size = 0x4, scoped, tag = 'scoped memory for model2_forward.1']
    #allocation9 [shape = 'u8[131072]{0}', space=vmem, size = 0x20000, scoped, tag = 'input window, operand 8, single buffered']
    #allocation10 [shape = 'u8[98304]{0}', space=vmem, size = 0x18000, scoped, tag = 'input window, operand 9, single buffered']
    #allocation11 [shape = 's32[1]{0}', space=sflag, size = 0x4, scoped, tag = 'scoped memory for model2_forward.1']
    #allocation12 [shape = 'u8[8192]{0}', space=vmem, size = 0x2000, scoped, tag = 'input window, operand 10, single buffered']
    %16 = vsyncpa [#allocation3], 0
    %17 = vsyncpa [#allocation5], 0
    %18 = vsyncpa [#allocation8], 0
    %19 = vsyncpa [#allocation11], 0
    // Predicated region
    $region2: #{model2_forward.1} parent=1 // pred_check
      _
    $region3: #{model2_forward.1} parent=1 // pred_check_branch
      %21 = sbr.rel (0) target = $region5
    $region4: #{model2_forward.1} parent=1 // pred_region
      _
    $region5: #{model2_forward.1} parent=1 // pred_fallthru
      _
    // Predicated region
    $region6: #{model2_forward.1} parent=1 // pred_check
      _
    $region7: #{model2_forward.1} parent=1 // pred_check_branch
      %23 = sbr.rel (0) target = $region9
    $region8: #{model2_forward.1} parent=1 // pred_region
      _
    $region9: #{model2_forward.1} parent=1 // pred_fallthru
      _
    // Predicated region
    $region10: #{model2_forward.1} parent=1 // pred_check
      _
    $region11: #{model2_forward.1} parent=1 // pred_check_branch
      %25 = sbr.rel (0) target = $region13
    $region12: #{model2_forward.1} parent=1 // pred_region
      _
    $region13: #{model2_forward.1} parent=1 // pred_fallthru
      _
    // Predicated region
    $region14: #{model2_forward.1} parent=1 // pred_check
      _
    $region15: #{model2_forward.1} parent=1 // pred_check_branch
      %27 = sbr.rel (0) target = $region17
    $region16: #{model2_forward.1} parent=1 // pred_region
      %29 = vsyncadd [#allocation3], 0
      %s30 = sshll.u32 %s3, 4
      %s31 = int_to_ptr.hbm [resolvable:$true] %s30
      %s32 = sshll.u32 [#allocation2], 4
      %s33 = int_to_ptr.vmem [resolvable:$true] %s32
      %38 = dma.hbm_to_vmem [thread:$0]  %s31, 640, %s33, [#allocation3], 128, 128, 8
    $region17: #{model2_forward.1} parent=1 // pred_fallthru
      _
    // Predicated region
    $region18: #{model2_forward.1} parent=1 // pred_check
      _
    $region19: #{model2_forward.1} parent=1 // pred_check_branch
      %40 = sbr.rel (0) target = $region21
    $region20: #{model2_forward.1} parent=1 // pred_region
      %42 = vsyncadd [#allocation5], 0
      %s43 = sshll.u32 %s4, 4
      %s44 = int_to_ptr.hbm [resolvable:$true] %s43
      %s45 = sshll.u32 [#allocation4], 4
      %s46 = int_to_ptr.vmem [resolvable:$true] %s45
      %51 = dma.hbm_to_vmem [thread:$0]  %s44, 640, %s46, [#allocation5], 128, 128, 8
    $region21: #{model2_forward.1} parent=1 // pred_fallthru
      _
    // Predicated region
    $region22: #{model2_forward.1} parent=1 // pred_check
      _
    $region23: #{model2_forward.1} parent=1 // pred_check_branch
      %53 = sbr.rel (0) target = $region25
    $region24: #{model2_forward.1} parent=1 // pred_region
      %55 = vsyncadd [#allocation5], 0
      %s56 = sshll.u32 %s5, 4
      %s57 = int_to_ptr.hbm [resolvable:$true] %s56
      %s58 = sshll.u32 [#allocation6], 4
      %s59 = int_to_ptr.vmem [resolvable:$true] %s58
      %64 = dma.hbm_to_vmem [thread:$0]  %s57, 256, %s59, [#allocation5], 128, 128, 8
    $region25: #{model2_forward.1} parent=1 // pred_fallthru
      _
    // Predicated region
    $region26: #{model2_forward.1} parent=1 // pred_check
      _
    $region27: #{model2_forward.1} parent=1 // pred_check_branch
      %66 = sbr.rel (0) target = $region29
    $region28: #{model2_forward.1} parent=1 // pred_region
      %68 = vsyncadd [#allocation8], 0
      %s69 = sshll.u32 %s6, 4
      %s70 = int_to_ptr.hbm [resolvable:$true] %s69
      %s71 = sshll.u32 [#allocation7], 4
      %s72 = int_to_ptr.vmem [resolvable:$true] %s71
      %77 = dma.hbm_to_vmem [thread:$0]  %s70, 256, %s72, [#allocation8], 128, 128, 8
    $region29: #{model2_forward.1} parent=1 // pred_fallthru
      _
    // Predicated region
    $region30: #{model2_forward.1} parent=1 // pred_check
      _
    $region31: #{model2_forward.1} parent=1 // pred_check_branch
      %79 = sbr.rel (0) target = $region33
    $region32: #{model2_forward.1} parent=1 // pred_region
      _
    $region33: #{model2_forward.1} parent=1 // pred_fallthru
      _
    // Predicated region
    $region34: #{model2_forward.1} parent=1 // pred_check
      _
    $region35: #{model2_forward.1} parent=1 // pred_check_branch
      %81 = sbr.rel (0) target = $region37
    $region36: #{model2_forward.1} parent=1 // pred_region
      %83 = vsyncadd [#allocation8], 0
      %s84 = sshll.u32 %s8, 4
      %s85 = int_to_ptr.hbm [resolvable:$true] %s84
      %s86 = sshll.u32 [#allocation9], 4
      %s87 = int_to_ptr.vmem [resolvable:$true] %s86
      %92 = dma.hbm_to_vmem [thread:$0]  %s85, 4096, %s87, [#allocation8], 256, 256, 16
    $region37: #{model2_forward.1} parent=1 // pred_fallthru
      _
    // Predicated region
    $region38: #{model2_forward.1} parent=1 // pred_check
      _
    $region39: #{model2_forward.1} parent=1 // pred_check_branch
      %94 = sbr.rel (0) target = $region41
    $region40: #{model2_forward.1} parent=1 // pred_region
      %96 = vsyncadd [#allocation11], 0
      %s97 = sshll.u32 %s9, 4
      %s98 = int_to_ptr.hbm [resolvable:$true] %s97
      %s99 = sshll.u32 [#allocation10], 4
      %s100 = int_to_ptr.vmem [resolvable:$true] %s99
      %105 = dma.hbm_to_vmem [thread:$0]  %s98, 3072, %s100, [#allocation11], 64, 64, 4
    $region41: #{model2_forward.1} parent=1 // pred_fallthru
      _
    // Predicated region
    $region42: #{model2_forward.1} parent=1 // pred_check
      _
    $region43: #{model2_forward.1} parent=1 // pred_check_branch
      %107 = sbr.rel (0) target = $region45
    $region44: #{model2_forward.1} parent=1 // pred_region
      %109 = vsyncadd [#allocation11], 0
      %s111 = sshll.u32 %s10, 4
      %s112 = int_to_ptr.hbm [resolvable:$true] %s111
      %s113 = sshll.u32 [#allocation12], 4
      %s114 = int_to_ptr.vmem [resolvable:$true] %s113
      %116 = dma.hbm_to_vmem [thread:$0]  %s112, 256, %s114, [#allocation11]
    $region45: #{model2_forward.1} parent=1 // pred_fallthru
      _
    // Predicated region
    $region46: #{model2_forward.1} parent=1 // pred_check
      _
    $region47: #{model2_forward.1} parent=1 // pred_check_branch
      %118 = sbr.rel (0) target = $region49
    $region48: #{model2_forward.1} parent=1 // pred_region
      %120 = dma.done [#allocation3], 640
    $region49: #{model2_forward.1} parent=1 // pred_fallthru
      _
    // Predicated region
    $region50: #{model2_forward.1} parent=1 // pred_check
      _
    $region51: #{model2_forward.1} parent=1 // pred_check_branch
      %122 = sbr.rel (0) target = $region53
    $region52: #{model2_forward.1} parent=1 // pred_region
      %124 = dma.done [#allocation5], 640
    $region53: #{model2_forward.1} parent=1 // pred_fallthru
      _
    // Predicated region
    $region54: #{model2_forward.1} parent=1 // pred_check
      _
    $region55: #{model2_forward.1} parent=1 // pred_check_branch
      %126 = sbr.rel (0) target = $region57
    $region56: #{model2_forward.1} parent=1 // pred_region
      %128 = dma.done [#allocation5], 256
    $region57: #{model2_forward.1} parent=1 // pred_fallthru
      _
    // Predicated region
    $region58: #{model2_forward.1} parent=1 // pred_check
      _
    $region59: #{model2_forward.1} parent=1 // pred_check_branch
      %130 = sbr.rel (0) target = $region61
    $region60: #{model2_forward.1} parent=1 // pred_region
      %132 = dma.done [#allocation8], 256
    $region61: #{model2_forward.1} parent=1 // pred_fallthru
      _
    // Predicated region
    $region62: #{model2_forward.1} parent=1 // pred_check
      _
    $region63: #{model2_forward.1} parent=1 // pred_check_branch
      %134 = sbr.rel (0) target = $region65
    $region64: #{model2_forward.1} parent=1 // pred_region
      %136 = dma.done [#allocation8], 4096
    $region65: #{model2_forward.1} parent=1 // pred_fallthru
      _
    // Predicated region
    $region66: #{model2_forward.1} parent=1 // pred_check
      _
    $region67: #{model2_forward.1} parent=1 // pred_check_branch
      %138 = sbr.rel (0) target = $region69
    $region68: #{model2_forward.1} parent=1 // pred_region
      %140 = dma.done [#allocation11], 3072
    $region69: #{model2_forward.1} parent=1 // pred_fallthru
      _
    // Predicated region
    $region70: #{model2_forward.1} parent=1 // pred_check
      _
    $region71: #{model2_forward.1} parent=1 // pred_check_branch
      %142 = sbr.rel (0) target = $region73
    $region72: #{model2_forward.1} parent=1 // pred_region
      %144 = dma.done [#allocation11], 256
    $region73: #{model2_forward.1} parent=1 // pred_fallthru
      _
    %v145 = vld [vmem:[#allocation12] ss:$8 sm:$0x3]
    %s146 = scalar_lea.vmem [#allocation12], 1
    %v147 = vld [vmem:[%s146] ss:$8 sm:$0x3]
    %v148 = vld [vmem:[#allocation12 + $0x2] ss:$0 sm:$0xff]
    %v149 = vld [vmem:[#allocation12 + $0x3] ss:$0 sm:$0xff]
    %v150 = vld [vmem:[#allocation12 + $0x4] ss:$0 sm:$0xff]
    %v151 = vld [vmem:[#allocation12 + $0x5] ss:$0 sm:$0xff]
    %v152 = vld [vmem:[%s0] sm:$0xff]
    %v153 = vld [vmem:[%s0 + $0x8] sm:$0xff]
    %v154 = vld [vmem:[%s0 + $0x10] sm:$0xff]
    %v155 = vld [vmem:[%s0 + $0x18] sm:$0xff]
    %v156 = vld [vmem:[%s0 + $0x20] sm:$0xff]
    %v157 = vld [vmem:[%s0 + $0x28] sm:$0xff]
    %v158 = vld [vmem:[%s0 + $0x30] sm:$0xff]
    %v159 = vld [vmem:[%s0 + $0x38] sm:$0xff]
    %v160 = vld [vmem:[%s1] sm:$0xff]
    %v161 = vld [vmem:[%s1 + $0x8] sm:$0xff]
    %v162 = vld [vmem:[%s1 + $0x10] sm:$0xff]
    %v163 = vld [vmem:[%s1 + $0x18] sm:$0xff]
    %v164 = vld [vmem:[%s1 + $0x20] sm:$0xff]
    %v165 = vld [vmem:[%s1 + $0x28] sm:$0xff]
    %v166 = vld [vmem:[%s1 + $0x30] sm:$0xff]
    %v167 = vld [vmem:[%s1 + $0x38] sm:$0xff]
    %v168 = vld [vmem:[%s1 + $0x40] sm:$0xff]
    %v169 = vld [vmem:[%s1 + $0x48] sm:$0xff]
    %v170 = vld [vmem:[%s1 + $0x50] sm:$0xff]
    %v171 = vld [vmem:[%s1 + $0x58] sm:$0xff]
    %v172 = vld [vmem:[%s1 + $0x60] sm:$0xff]
    %v173 = vld [vmem:[%s1 + $0x68] sm:$0xff]
    %v174 = vld [vmem:[%s1 + $0x70] sm:$0xff]
    %v175 = vld [vmem:[%s1 + $0x78] sm:$0xff]
    %v176 = vld [vmem:[%s1 + $0x80] sm:$0xff]
    %v177 = vld [vmem:[%s1 + $0x88] sm:$0xff]
    %v178 = vld [vmem:[%s1 + $0x90] sm:$0xff]
    %v179 = vld [vmem:[%s1 + $0x98] sm:$0xff]
    %v180 = vld [vmem:[%s1 + $0xa0] sm:$0xff]
    %v181 = vld [vmem:[%s1 + $0xa8] sm:$0xff]
    %v182 = vld [vmem:[%s1 + $0xb0] sm:$0xff]
    %v183 = vld [vmem:[%s1 + $0xb8] sm:$0xff]
    %v184 = vld [vmem:[%s1 + $0xc0] sm:$0xff]
    %v185 = vld [vmem:[%s1 + $0xc8] sm:$0xff]
    %v186 = vld [vmem:[%s1 + $0xd0] sm:$0xff]
    %v187 = vld [vmem:[%s1 + $0xd8] sm:$0xff]
    %v188 = vld [vmem:[%s1 + $0xe0] sm:$0xff]
    %v189 = vld [vmem:[%s1 + $0xe8] sm:$0xff]
    %v190 = vld [vmem:[%s1 + $0xf0] sm:$0xff]
    %v191 = vld [vmem:[%s1 + $0xf8] sm:$0xff]
    %v193 = vperm.slane %v145, 0
    %v194 = vperm.slane %v145, 1
    %v205 = vunpack.c.l.b16 %v152
    %v206 = vunpack.c.h.b16 %v152
    %v207 = vunpack.c.l.b16 %v153
    %v208 = vunpack.c.h.b16 %v153
    %v209 = vunpack.c.l.b16 %v154
    %v210 = vunpack.c.h.b16 %v154
    %v211 = vunpack.c.l.b16 %v155
    %v212 = vunpack.c.h.b16 %v155
    %v213 = vunpack.c.l.b16 %v156
    %v214 = vunpack.c.h.b16 %v156
    %v215 = vunpack.c.l.b16 %v157
    %v216 = vunpack.c.h.b16 %v157
    %v217 = vunpack.c.l.b16 %v158
    %v218 = vunpack.c.h.b16 %v158
    %v219 = vunpack.c.l.b16 %v159
    %v220 = vunpack.c.h.b16 %v159
    %v221 = vpack.c.b16 %v207, %v205
    %v222 = vpack.c.b16 %v208, %v206
    %v223 = vpack.c.b16 %v211, %v209
    %v224 = vpack.c.b16 %v212, %v210
    %v225 = vpack.c.b16 %v215, %v213
    %v226 = vpack.c.b16 %v216, %v214
    %v227 = vpack.c.b16 %v219, %v217
    %v228 = vpack.c.b16 %v220, %v218
    %v269 = vunpack.c.l.b16 %v160
    %v270 = vunpack.c.h.b16 %v160
    %v271 = vunpack.c.l.b16 %v161
    %v272 = vunpack.c.h.b16 %v161
    %v273 = vunpack.c.l.b16 %v162
    %v274 = vunpack.c.h.b16 %v162
    %v275 = vunpack.c.l.b16 %v163
    %v276 = vunpack.c.h.b16 %v163
    %v277 = vunpack.c.l.b16 %v164
    %v278 = vunpack.c.h.b16 %v164
    %v279 = vunpack.c.l.b16 %v165
    %v280 = vunpack.c.h.b16 %v165
    %v281 = vunpack.c.l.b16 %v166
    %v282 = vunpack.c.h.b16 %v166
    %v283 = vunpack.c.l.b16 %v167
    %v284 = vunpack.c.h.b16 %v167
    %v285 = vunpack.c.l.b16 %v168
    %v286 = vunpack.c.h.b16 %v168
    %v287 = vunpack.c.l.b16 %v169
    %v288 = vunpack.c.h.b16 %v169
    %v289 = vunpack.c.l.b16 %v170
    %v290 = vunpack.c.h.b16 %v170
    %v291 = vunpack.c.l.b16 %v171
    %v292 = vunpack.c.h.b16 %v171
    %v293 = vunpack.c.l.b16 %v172
    %v294 = vunpack.c.h.b16 %v172
    %v295 = vunpack.c.l.b16 %v173
    %v296 = vunpack.c.h.b16 %v173
    %v297 = vunpack.c.l.b16 %v174
    %v298 = vunpack.c.h.b16 %v174
    %v299 = vunpack.c.l.b16 %v175
    %v300 = vunpack.c.h.b16 %v175
    %v301 = vunpack.c.l.b16 %v176
    %v302 = vunpack.c.h.b16 %v176
    %v303 = vunpack.c.l.b16 %v177
    %v304 = vunpack.c.h.b16 %v177
    %v305 = vunpack.c.l.b16 %v178
    %v306 = vunpack.c.h.b16 %v178
    %v307 = vunpack.c.l.b16 %v179
    %v308 = vunpack.c.h.b16 %v179
    %v309 = vunpack.c.l.b16 %v180
    %v310 = vunpack.c.h.b16 %v180
    %v311 = vunpack.c.l.b16 %v181
    %v312 = vunpack.c.h.b16 %v181
    %v313 = vunpack.c.l.b16 %v182
    %v314 = vunpack.c.h.b16 %v182
    %v315 = vunpack.c.l.b16 %v183
    %v316 = vunpack.c.h.b16 %v183
    %v317 = vunpack.c.l.b16 %v184
    %v318 = vunpack.c.h.b16 %v184
    %v319 = vunpack.c.l.b16 %v185
    %v320 = vunpack.c.h.b16 %v185
    %v321 = vunpack.c.l.b16 %v186
    %v322 = vunpack.c.h.b16 %v186
    %v323 = vunpack.c.l.b16 %v187
    %v324 = vunpack.c.h.b16 %v187
    %v325 = vunpack.c.l.b16 %v188
    %v326 = vunpack.c.h.b16 %v188
    %v327 = vunpack.c.l.b16 %v189
    %v328 = vunpack.c.h.b16 %v189
    %v329 = vunpack.c.l.b16 %v190
    %v330 = vunpack.c.h.b16 %v190
    %v331 = vunpack.c.l.b16 %v191
    %v332 = vunpack.c.h.b16 %v191
    %v333 = vpack.c.b16 %v271, %v269
    %v334 = vpack.c.b16 %v272, %v270
    %v335 = vpack.c.b16 %v275, %v273
    %v336 = vpack.c.b16 %v276, %v274
    %v337 = vpack.c.b16 %v279, %v277
    %v338 = vpack.c.b16 %v280, %v278
    %v339 = vpack.c.b16 %v283, %v281
    %v340 = vpack.c.b16 %v284, %v282
    %v341 = vpack.c.b16 %v287, %v285
    %v342 = vpack.c.b16 %v288, %v286
    %v343 = vpack.c.b16 %v291, %v289
    %v344 = vpack.c.b16 %v292, %v290
    %v345 = vpack.c.b16 %v295, %v293
    %v346 = vpack.c.b16 %v296, %v294
    %v347 = vpack.c.b16 %v299, %v297
    %v348 = vpack.c.b16 %v300, %v298
    %v349 = vpack.c.b16 %v303, %v301
    %v350 = vpack.c.b16 %v304, %v302
    %v351 = vpack.c.b16 %v307, %v305
    %v352 = vpack.c.b16 %v308, %v306
    %v353 = vpack.c.b16 %v311, %v309
    %v354 = vpack.c.b16 %v312, %v310
    %v355 = vpack.c.b16 %v315, %v313
    %v356 = vpack.c.b16 %v316, %v314
    %v357 = vpack.c.b16 %v319, %v317
    %v358 = vpack.c.b16 %v320, %v318
    %v359 = vpack.c.b16 %v323, %v321
    %v360 = vpack.c.b16 %v324, %v322
    %v361 = vpack.c.b16 %v327, %v325
    %v362 = vpack.c.b16 %v328, %v326
    %v363 = vpack.c.b16 %v331, %v329
    %v364 = vpack.c.b16 %v332, %v330
    %397 = vmatpush.bf16.msra.mxu0 %v347
    %398 = vmatpush.bf16.msra.mxu0 %v345
    %399 = vmatpush.bf16.msra.mxu0 %v343
    %400 = vmatpush.bf16.msra.mxu0 %v341
    %401 = vmatpush.bf16.msra.mxu0 %v339
    %402 = vmatpush.bf16.msra.mxu0 %v337
    %403 = vmatpush.bf16.msra.mxu0 %v335
    %404 = vmatpush.bf16.msra.mxu0 %v333
    %405 = vmatmul.bf16.gmra.mxu0 %v221
    %v406 = vpop.f32.mrf.mxu0
    %v407 = vadd.f32 %v193, %v406
    %v408 = vpop.f32.mrf.mxu0
    %v409 = vadd.f32 %v193, %v408
    %410 = vmatmul.bf16.gmra.mxu0 %v223
    %v411 = vpop.f32.mrf.mxu0
    %v412 = vadd.f32 %v193, %v411
    %v413 = vpop.f32.mrf.mxu0
    %v414 = vadd.f32 %v193, %v413
    %415 = vmatmul.bf16.gmra.mxu0 %v225
    %v416 = vpop.f32.mrf.mxu0
    %v417 = vadd.f32 %v193, %v416
    %v418 = vpop.f32.mrf.mxu0
    %v419 = vadd.f32 %v193, %v418
    %420 = vmatmul.bf16.gmra.mxu0 %v227
    %v421 = vpop.f32.mrf.mxu0
    %v422 = vadd.f32 %v193, %v421
    %v423 = vpop.f32.mrf.mxu0
    %v424 = vadd.f32 %v193, %v423
    %425 = vdwg.mxu0
    %426 = vmatpush.bf16.msra.mxu0 %v363
    %427 = vmatpush.bf16.msra.mxu0 %v361
    %428 = vmatpush.bf16.msra.mxu0 %v359
    %429 = vmatpush.bf16.msra.mxu0 %v357
    %430 = vmatpush.bf16.msra.mxu0 %v355
    %431 = vmatpush.bf16.msra.mxu0 %v353
    %432 = vmatpush.bf16.msra.mxu0 %v351
    %433 = vmatpush.bf16.msra.mxu0 %v349
    %434 = vmatmul.bf16.gmra.mxu0 %v222
    %v435 = vpop.f32.mrf.mxu0
    %v436 = vadd.f32 %v407, %v435
    %v437 = vpop.f32.mrf.mxu0
    %v438 = vadd.f32 %v409, %v437
    %439 = vmatmul.bf16.gmra.mxu0 %v224
    %v440 = vpop.f32.mrf.mxu0
    %v441 = vadd.f32 %v412, %v440
    %v442 = vpop.f32.mrf.mxu0
    %v443 = vadd.f32 %v414, %v442
    %444 = vmatmul.bf16.gmra.mxu0 %v226
    %v445 = vpop.f32.mrf.mxu0
    %v446 = vadd.f32 %v417, %v445
    %v447 = vpop.f32.mrf.mxu0
    %v448 = vadd.f32 %v419, %v447
    %449 = vmatmul.bf16.gmra.mxu0 %v228
    %v450 = vpop.f32.mrf.mxu0
    %v451 = vadd.f32 %v422, %v450
    %v452 = vpop.f32.mrf.mxu0
    %v453 = vadd.f32 %v424, %v452
    %454 = vdwg.mxu0
    %455 = vmatpush.bf16.msra.mxu0 %v348
    %456 = vmatpush.bf16.msra.mxu0 %v346
    %457 = vmatpush.bf16.msra.mxu0 %v344
    %458 = vmatpush.bf16.msra.mxu0 %v342
    %459 = vmatpush.bf16.msra.mxu0 %v340
    %460 = vmatpush.bf16.msra.mxu0 %v338
    %461 = vmatpush.bf16.msra.mxu0 %v336
    %462 = vmatpush.bf16.msra.mxu0 %v334
    %463 = vmatmul.bf16.gmra.mxu0 %v221
    %v464 = vpop.f32.mrf.mxu0
    %v465 = vadd.f32 %v194, %v464
    %v466 = vpop.f32.mrf.mxu0
    %v467 = vadd.f32 %v194, %v466
    %468 = vmatmul.bf16.gmra.mxu0 %v223
    %v469 = vpop.f32.mrf.mxu0
    %v470 = vadd.f32 %v194, %v469
    %v471 = vpop.f32.mrf.mxu0
    %v472 = vadd.f32 %v194, %v471
    %473 = vmatmul.bf16.gmra.mxu0 %v225
    %v474 = vpop.f32.mrf.mxu0
    %v475 = vadd.f32 %v194, %v474
    %v476 = vpop.f32.mrf.mxu0
    %v477 = vadd.f32 %v194, %v476
    %478 = vmatmul.bf16.gmra.mxu0 %v227
    %v479 = vpop.f32.mrf.mxu0
    %v480 = vadd.f32 %v194, %v479
    %v481 = vpop.f32.mrf.mxu0
    %v482 = vadd.f32 %v194, %v481
    %483 = vdwg.mxu0
    %484 = vmatpush.bf16.msra.mxu0 %v364
    %485 = vmatpush.bf16.msra.mxu0 %v362
    %486 = vmatpush.bf16.msra.mxu0 %v360
    %487 = vmatpush.bf16.msra.mxu0 %v358
    %488 = vmatpush.bf16.msra.mxu0 %v356
    %489 = vmatpush.bf16.msra.mxu0 %v354
    %490 = vmatpush.bf16.msra.mxu0 %v352
    %491 = vmatpush.bf16.msra.mxu0 %v350
    %492 = vmatmul.bf16.gmra.mxu0 %v222
    %v493 = vpop.f32.mrf.mxu0
    %v494 = vadd.f32 %v465, %v493
    %v495 = vpop.f32.mrf.mxu0
    %v496 = vadd.f32 %v467, %v495
    %497 = vmatmul.bf16.gmra.mxu0 %v224
    %v498 = vpop.f32.mrf.mxu0
    %v499 = vadd.f32 %v470, %v498
    %v500 = vpop.f32.mrf.mxu0
    %v501 = vadd.f32 %v472, %v500
    %502 = vmatmul.bf16.gmra.mxu0 %v226
    %v503 = vpop.f32.mrf.mxu0
    %v504 = vadd.f32 %v475, %v503
    %v505 = vpop.f32.mrf.mxu0
    %v506 = vadd.f32 %v477, %v505
    %507 = vmatmul.bf16.gmra.mxu0 %v228
    %v508 = vpop.f32.mrf.mxu0
    %v509 = vadd.f32 %v480, %v508
    %v510 = vpop.f32.mrf.mxu0
    %v511 = vadd.f32 %v482, %v510
    %512 = vdwg.mxu0
    %v513 = vmax.f32 %v436, 0.0
    %v514 = vmax.f32 %v494, 0.0
    %v515 = vmax.f32 %v438, 0.0
    %v516 = vmax.f32 %v496, 0.0
    %v517 = vmax.f32 %v441, 0.0
    %v518 = vmax.f32 %v499, 0.0
    %v519 = vmax.f32 %v443, 0.0
    %v520 = vmax.f32 %v501, 0.0
    %v521 = vmax.f32 %v446, 0.0
    %v522 = vmax.f32 %v504, 0.0
    %v523 = vmax.f32 %v448, 0.0
    %v524 = vmax.f32 %v506, 0.0
    %v525 = vmax.f32 %v451, 0.0
    %v526 = vmax.f32 %v509, 0.0
    %v527 = vmax.f32 %v453, 0.0
    %v528 = vmax.f32 %v511, 0.0
    %v529 = vmax.f32 %v513, %v514
    %v530 = vmax.f32 %v515, %v516
    %v531 = vmax.f32 %v517, %v518
    %v532 = vmax.f32 %v519, %v520
    %v533 = vmax.f32 %v521, %v522
    %v534 = vmax.f32 %v523, %v524
    %v535 = vmax.f32 %v525, %v526
    %v536 = vmax.f32 %v527, %v528
    %v537 = vld [vmem:[#allocation2] sm:$0xff]
    %v538 = vld [vmem:[#allocation2 + $0x8] sm:$0xff]
    %v539 = vld [vmem:[#allocation2 + $0x10] sm:$0xff]
    %v540 = vld [vmem:[#allocation2 + $0x18] sm:$0xff]
    %v541 = vld [vmem:[#allocation2 + $0x20] sm:$0xff]
    %vm542 = vcmask 523264
    %v544 = vsel %vm542, %v537, 0
    %v547 = vsel %vm542, %v538, 0
    %v550 = vsel %vm542, %v539, 0
    %v553 = vsel %vm542, %v540, 0
    %v556 = vsel %vm542, %v541, 0
    %558 = vmatpush.msra.mxu0 0.0
    %559 = vmatpush.msra.mxu0 0.0
    %560 = vmatpush.msra.mxu0 0.0
    %561 = vmatpush.msra.mxu0 0.0
    %562 = vmatpush.msra.mxu0 0.0
    %563 = vmatpush.msra.mxu0 0.0
    %564 = vmatpush.msra.mxu0 0.0
    %565 = vmatpush.msra.mxu0 0.0
    %566 = vmatpush.msra.mxu0 %v536
    %567 = vmatpush.msra.mxu0 %v535
    %568 = vmatpush.msra.mxu0 %v534
    %569 = vmatpush.msra.mxu0 %v533
    %570 = vmatpush.msra.mxu0 %v532
    %571 = vmatpush.msra.mxu0 %v531
    %572 = vmatpush.msra.mxu0 %v530
    %573 = vmatpush.msra.mxu0 %v529
    %574 = vmatmul.f32.gmra.mxu0 %v544
    %v575 = vpop.f32.mrf.mxu0
    %v576 = vadd.f32 0.0, %v575
    %577 = vmatmul.f32.gmra.mxu0 %v547
    %v578 = vpop.f32.mrf.mxu0
    %v579 = vadd.f32 0.0, %v578
    %580 = vmatmul.f32.gmra.mxu0 %v550
    %v581 = vpop.f32.mrf.mxu0
    %v582 = vadd.f32 0.0, %v581
    %583 = vmatmul.f32.gmra.mxu0 %v553
    %v584 = vpop.f32.mrf.mxu0
    %v585 = vadd.f32 0.0, %v584
    %586 = vmatmul.f32.gmra.mxu0 %v556
    %v587 = vpop.f32.mrf.mxu0
    %v588 = vadd.f32 0.0, %v587
    %589 = vdwg.mxu0
    %v590 = vld [vmem:[#allocation4] sm:$0xff]
    %v591 = vld [vmem:[#allocation4 + $0x8] sm:$0xff]
    %v592 = vld [vmem:[#allocation4 + $0x10] sm:$0xff]
    %v593 = vld [vmem:[#allocation4 + $0x18] sm:$0xff]
    %v594 = vld [vmem:[#allocation4 + $0x20] sm:$0xff]
    %v596 = vsel %vm542, %v590, 0
    %v599 = vsel %vm542, %v591, 0
    %v602 = vsel %vm542, %v592, 0
    %v605 = vsel %vm542, %v593, 0
    %v608 = vsel %vm542, %v594, 0
    %610 = vmatpush.msra.mxu0 0.0
    %611 = vmatpush.msra.mxu0 0.0
    %612 = vmatpush.msra.mxu0 0.0
    %613 = vmatpush.msra.mxu0 0.0
    %614 = vmatpush.msra.mxu0 0.0
    %615 = vmatpush.msra.mxu0 0.0
    %616 = vmatpush.msra.mxu0 0.0
    %617 = vmatpush.msra.mxu0 0.0
    %618 = vmatpush.msra.mxu0 %v536
    %619 = vmatpush.msra.mxu0 %v535
    %620 = vmatpush.msra.mxu0 %v534
    %621 = vmatpush.msra.mxu0 %v533
    %622 = vmatpush.msra.mxu0 %v532
    %623 = vmatpush.msra.mxu0 %v531
    %624 = vmatpush.msra.mxu0 %v530
    %625 = vmatpush.msra.mxu0 %v529
    %626 = vmatmul.f32.gmra.mxu0 %v596
    %v627 = vpop.f32.mrf.mxu0
    %v628 = vadd.f32 0.0, %v627
    %629 = vmatmul.f32.gmra.mxu0 %v599
    %v630 = vpop.f32.mrf.mxu0
    %v631 = vadd.f32 0.0, %v630
    %632 = vmatmul.f32.gmra.mxu0 %v602
    %v633 = vpop.f32.mrf.mxu0
    %v634 = vadd.f32 0.0, %v633
    %635 = vmatmul.f32.gmra.mxu0 %v605
    %v636 = vpop.f32.mrf.mxu0
    %v637 = vadd.f32 0.0, %v636
    %638 = vmatmul.f32.gmra.mxu0 %v608
    %v639 = vpop.f32.mrf.mxu0
    %v640 = vadd.f32 0.0, %v639
    %641 = vdwg.mxu0
    %v642 = vmax.f32 %v576, %v628
    %v643 = vmax.f32 %v579, %v631
    %v644 = vmax.f32 %v582, %v634
    %v645 = vmax.f32 %v585, %v637
    %v646 = vmax.f32 %v588, %v640
    %v647 = vpack.c.bf16 %v643, %v642
    %v648 = vpack.c.bf16 %v645, %v644
    %v649 = vld [vmem:[%s2] sm:$0xff]
    %v650 = vld [vmem:[%s2 + $0x8] sm:$0xff]
    %v651 = vld [vmem:[%s2 + $0x10] sm:$0xff]
    %v652 = vld [vmem:[%s2 + $0x18] sm:$0xff]
    %v653 = vld [vmem:[%s2 + $0x20] sm:$0xff]
    %v654 = vld [vmem:[%s2 + $0x28] sm:$0xff]
    %v655 = vld [vmem:[%s2 + $0x30] sm:$0xff]
    %v656 = vld [vmem:[%s2 + $0x38] sm:$0xff]
    %v657 = vld [vmem:[%s2 + $0x40] sm:$0xff]
    %v658 = vld [vmem:[%s2 + $0x48] sm:$0xff]
    %v659 = vld [vmem:[%s2 + $0x50] sm:$0xff]
    %v660 = vld [vmem:[%s2 + $0x58] sm:$0xff]
    %v661 = vld [vmem:[%s2 + $0x60] sm:$0xff]
    %v662 = vld [vmem:[%s2 + $0x68] sm:$0xff]
    %v663 = vld [vmem:[%s2 + $0x70] sm:$0xff]
    %v664 = vld [vmem:[%s2 + $0x78] sm:$0xff]
    %v665 = vpack.c.bf16 %v646, %v646
    %s666 = scalar_lea.vmem %s2, 128
    %v667 = vld [vmem:[%s666] sm:$0xff]
    %v668 = vld [vmem:[%s666 + $0x8] sm:$0xff]
    %v669 = vld [vmem:[%s666 + $0x10] sm:$0xff]
    %v670 = vld [vmem:[%s666 + $0x18] sm:$0xff]
    %v671 = vld [vmem:[%s666 + $0x20] sm:$0xff]
    %v672 = vld [vmem:[%s666 + $0x28] sm:$0xff]
    %v673 = vld [vmem:[%s666 + $0x30] sm:$0xff]
    %v674 = vld [vmem:[%s666 + $0x38] sm:$0xff]
    %v675 = vld [vmem:[%s666 + $0x40] sm:$0xff]
    %v676 = vld [vmem:[%s666 + $0x48] sm:$0xff]
    %v677 = vld [vmem:[%s666 + $0x50] sm:$0xff]
    %v678 = vld [vmem:[%s666 + $0x58] sm:$0xff]
    %v679 = vld [vmem:[%s666 + $0x60] sm:$0xff]
    %v680 = vld [vmem:[%s666 + $0x68] sm:$0xff]
    %v681 = vld [vmem:[%s666 + $0x70] sm:$0xff]
    %v682 = vld [vmem:[%s666 + $0x78] sm:$0xff]
    %vm683 = vsmask.f32 7424
    %v685 = vshrl.u32 %v647, 16
    %v687 = vshll.u32 %v647, 16
    %v689 = vrot.slane %v687, 1
    %v690 = vor.u32 %v685, %v689
    %v692 = vshll.u32 %v648, 16
    %v694 = vrot.slane %v692, 1
    %v695 = vsel %vm683, %v690, %v694
    %v696 = vshrl.u32 %v648, 16
    %v698 = vor.u32 %v696, %v694
    %v700 = vshll.u32 %v665, 16
    %v702 = vrot.slane %v700, 1
    %v703 = vsel %vm683, %v698, %v702
    %v722 = vunpack.c.l.b16 %v667
    %v723 = vunpack.c.h.b16 %v667
    %v724 = vunpack.c.l.b16 %v668
    %v725 = vunpack.c.h.b16 %v668
    %v726 = vunpack.c.l.b16 %v669
    %v727 = vunpack.c.h.b16 %v669
    %v728 = vunpack.c.l.b16 %v670
    %v729 = vunpack.c.h.b16 %v670
    %v730 = vunpack.c.l.b16 %v671
    %v731 = vunpack.c.h.b16 %v671
    %v732 = vunpack.c.l.b16 %v672
    %v733 = vunpack.c.h.b16 %v672
    %v734 = vunpack.c.l.b16 %v673
    %v735 = vunpack.c.h.b16 %v673
    %v736 = vunpack.c.l.b16 %v674
    %v737 = vunpack.c.h.b16 %v674
    %v738 = vunpack.c.l.b16 %v675
    %v739 = vunpack.c.h.b16 %v675
    %v740 = vunpack.c.l.b16 %v676
    %v741 = vunpack.c.h.b16 %v676
    %v742 = vunpack.c.l.b16 %v677
    %v743 = vunpack.c.h.b16 %v677
    %v744 = vunpack.c.l.b16 %v678
    %v745 = vunpack.c.h.b16 %v678
    %v746 = vunpack.c.l.b16 %v679
    %v747 = vunpack.c.h.b16 %v679
    %v748 = vunpack.c.l.b16 %v680
    %v749 = vunpack.c.h.b16 %v680
    %v750 = vunpack.c.l.b16 %v681
    %v751 = vunpack.c.h.b16 %v681
    %v752 = vunpack.c.l.b16 %v682
    %v753 = vunpack.c.h.b16 %v682
    %v754 = vpack.c.b16 %v724, %v722
    %v755 = vpack.c.b16 %v725, %v723
    %v756 = vpack.c.b16 %v728, %v726
    %v757 = vpack.c.b16 %v729, %v727
    %v758 = vpack.c.b16 %v732, %v730
    %v759 = vpack.c.b16 %v733, %v731
    %v760 = vpack.c.b16 %v736, %v734
    %v761 = vpack.c.b16 %v737, %v735
    %v762 = vpack.c.b16 %v740, %v738
    %v763 = vpack.c.b16 %v741, %v739
    %v764 = vpack.c.b16 %v744, %v742
    %v765 = vpack.c.b16 %v745, %v743
    %v766 = vpack.c.b16 %v748, %v746
    %v767 = vpack.c.b16 %v749, %v747
    %v768 = vpack.c.b16 %v752, %v750
    %v769 = vpack.c.b16 %v753, %v751
    %786 = vmatpush.bf16.msra.mxu0 %v768
    %787 = vmatpush.bf16.msra.mxu0 %v766
    %788 = vmatpush.bf16.msra.mxu0 %v764
    %789 = vmatpush.bf16.msra.mxu0 %v762
    %790 = vmatpush.bf16.msra.mxu0 %v760
    %791 = vmatpush.bf16.msra.mxu0 %v758
    %792 = vmatpush.bf16.msra.mxu0 %v756
    %793 = vmatpush.bf16.msra.mxu0 %v754
    %794 = vmatmul.bf16.gmra.mxu0 %v695
    %v795 = vpop.f32.mrf.mxu0
    %v796 = vadd.f32 0.0, %v795
    %v797 = vpop.f32.mrf.mxu0
    %v798 = vadd.f32 0.0, %v797
    %799 = vmatmul.bf16.gmra.mxu0 %v703
    %v800 = vpop.f32.mrf.mxu0
    %v801 = vadd.f32 0.0, %v800
    %v802 = vpop.f32.mrf.mxu0
    %v803 = vadd.f32 0.0, %v802
    %804 = vdwg.mxu0
    %805 = vmatpush.bf16.msra.mxu0 %v769
    %806 = vmatpush.bf16.msra.mxu0 %v767
    %807 = vmatpush.bf16.msra.mxu0 %v765
    %808 = vmatpush.bf16.msra.mxu0 %v763
    %809 = vmatpush.bf16.msra.mxu0 %v761
    %810 = vmatpush.bf16.msra.mxu0 %v759
    %811 = vmatpush.bf16.msra.mxu0 %v757
    %812 = vmatpush.bf16.msra.mxu0 %v755
    %813 = vmatmul.bf16.gmra.mxu0 %v695
    %v814 = vpop.f32.mrf.mxu0
    %v815 = vadd.f32 0.0, %v814
    %v816 = vpop.f32.mrf.mxu0
    %v817 = vadd.f32 0.0, %v816
    %818 = vmatmul.bf16.gmra.mxu0 %v703
    %v819 = vpop.f32.mrf.mxu0
    %v820 = vadd.f32 0.0, %v819
    %v821 = vpop.f32.mrf.mxu0
    %v822 = vadd.f32 0.0, %v821
    %823 = vdwg.mxu0
    %v840 = vunpack.c.l.b16 %v649
    %v841 = vunpack.c.h.b16 %v649
    %v842 = vunpack.c.l.b16 %v650
    %v843 = vunpack.c.h.b16 %v650
    %v844 = vunpack.c.l.b16 %v651
    %v845 = vunpack.c.h.b16 %v651
    %v846 = vunpack.c.l.b16 %v652
    %v847 = vunpack.c.h.b16 %v652
    %v848 = vunpack.c.l.b16 %v653
    %v849 = vunpack.c.h.b16 %v653
    %v850 = vunpack.c.l.b16 %v654
    %v851 = vunpack.c.h.b16 %v654
    %v852 = vunpack.c.l.b16 %v655
    %v853 = vunpack.c.h.b16 %v655
    %v854 = vunpack.c.l.b16 %v656
    %v855 = vunpack.c.h.b16 %v656
    %v856 = vunpack.c.l.b16 %v657
    %v857 = vunpack.c.h.b16 %v657
    %v858 = vunpack.c.l.b16 %v658
    %v859 = vunpack.c.h.b16 %v658
    %v860 = vunpack.c.l.b16 %v659
    %v861 = vunpack.c.h.b16 %v659
    %v862 = vunpack.c.l.b16 %v660
    %v863 = vunpack.c.h.b16 %v660
    %v864 = vunpack.c.l.b16 %v661
    %v865 = vunpack.c.h.b16 %v661
    %v866 = vunpack.c.l.b16 %v662
    %v867 = vunpack.c.h.b16 %v662
    %v868 = vunpack.c.l.b16 %v663
    %v869 = vunpack.c.h.b16 %v663
    %v870 = vunpack.c.l.b16 %v664
    %v871 = vunpack.c.h.b16 %v664
    %v872 = vpack.c.b16 %v842, %v840
    %v873 = vpack.c.b16 %v843, %v841
    %v874 = vpack.c.b16 %v846, %v844
    %v875 = vpack.c.b16 %v847, %v845
    %v876 = vpack.c.b16 %v850, %v848
    %v877 = vpack.c.b16 %v851, %v849
    %v878 = vpack.c.b16 %v854, %v852
    %v879 = vpack.c.b16 %v855, %v853
    %v880 = vpack.c.b16 %v858, %v856
    %v881 = vpack.c.b16 %v859, %v857
    %v882 = vpack.c.b16 %v862, %v860
    %v883 = vpack.c.b16 %v863, %v861
    %v884 = vpack.c.b16 %v866, %v864
    %v885 = vpack.c.b16 %v867, %v865
    %v886 = vpack.c.b16 %v870, %v868
    %v887 = vpack.c.b16 %v871, %v869
    %904 = vmatpush.bf16.msra.mxu0 %v886
    %905 = vmatpush.bf16.msra.mxu0 %v884
    %906 = vmatpush.bf16.msra.mxu0 %v882
    %907 = vmatpush.bf16.msra.mxu0 %v880
    %908 = vmatpush.bf16.msra.mxu0 %v878
    %909 = vmatpush.bf16.msra.mxu0 %v876
    %910 = vmatpush.bf16.msra.mxu0 %v874
    %911 = vmatpush.bf16.msra.mxu0 %v872
    %912 = vmatmul.bf16.gmra.mxu0 %v647
    %v913 = vpop.f32.mrf.mxu0
    %v914 = vadd.f32 %v796, %v913
    %v915 = vpop.f32.mrf.mxu0
    %v916 = vadd.f32 %v798, %v915
    %917 = vmatmul.bf16.gmra.mxu0 %v648
    %v918 = vpop.f32.mrf.mxu0
    %v919 = vadd.f32 %v801, %v918
    %v920 = vpop.f32.mrf.mxu0
    %v921 = vadd.f32 %v803, %v920
    %922 = vdwg.mxu0
    %923 = vmatpush.bf16.msra.mxu0 %v887
    %924 = vmatpush.bf16.msra.mxu0 %v885
    %925 = vmatpush.bf16.msra.mxu0 %v883
    %926 = vmatpush.bf16.msra.mxu0 %v881
    %927 = vmatpush.bf16.msra.mxu0 %v879
    %928 = vmatpush.bf16.msra.mxu0 %v877
    %929 = vmatpush.bf16.msra.mxu0 %v875
    %930 = vmatpush.bf16.msra.mxu0 %v873
    %931 = vmatmul.bf16.gmra.mxu0 %v647
    %v932 = vpop.f32.mrf.mxu0
    %v933 = vadd.f32 %v815, %v932
    %v934 = vpop.f32.mrf.mxu0
    %v935 = vadd.f32 %v817, %v934
    %936 = vmatmul.bf16.gmra.mxu0 %v648
    %v937 = vpop.f32.mrf.mxu0
    %v938 = vadd.f32 %v820, %v937
    %v939 = vpop.f32.mrf.mxu0
    %v940 = vadd.f32 %v822, %v939
    %941 = vdwg.mxu0
    %s942 = scalar_lea.vmem %s2, 256
    %v943 = vld [vmem:[%s942] sm:$0xff]
    %v944 = vld [vmem:[%s942 + $0x8] sm:$0xff]
    %v945 = vld [vmem:[%s942 + $0x10] sm:$0xff]
    %v946 = vld [vmem:[%s942 + $0x18] sm:$0xff]
    %v947 = vld [vmem:[%s942 + $0x20] sm:$0xff]
    %v948 = vld [vmem:[%s942 + $0x28] sm:$0xff]
    %v949 = vld [vmem:[%s942 + $0x30] sm:$0xff]
    %v950 = vld [vmem:[%s942 + $0x38] sm:$0xff]
    %v951 = vld [vmem:[%s942 + $0x40] sm:$0xff]
    %v952 = vld [vmem:[%s942 + $0x48] sm:$0xff]
    %v953 = vld [vmem:[%s942 + $0x50] sm:$0xff]
    %v954 = vld [vmem:[%s942 + $0x58] sm:$0xff]
    %v955 = vld [vmem:[%s942 + $0x60] sm:$0xff]
    %v956 = vld [vmem:[%s942 + $0x68] sm:$0xff]
    %v957 = vld [vmem:[%s942 + $0x70] sm:$0xff]
    %v958 = vld [vmem:[%s942 + $0x78] sm:$0xff]
    %vm962 = vcmask 1046528
    %v963 = vrot.slane %v647, 1
    %v964 = vrot.slane %v648, 1
    %v965 = vsel %vm962, %v963, %v964
    %v966 = vrot.slane %v665, 1
    %v967 = vsel %vm962, %v964, %v966
    %v986 = vunpack.c.l.b16 %v943
    %v987 = vunpack.c.h.b16 %v943
    %v988 = vunpack.c.l.b16 %v944
    %v989 = vunpack.c.h.b16 %v944
    %v990 = vunpack.c.l.b16 %v945
    %v991 = vunpack.c.h.b16 %v945
    %v992 = vunpack.c.l.b16 %v946
    %v993 = vunpack.c.h.b16 %v946
    %v994 = vunpack.c.l.b16 %v947
    %v995 = vunpack.c.h.b16 %v947
    %v996 = vunpack.c.l.b16 %v948
    %v997 = vunpack.c.h.b16 %v948
    %v998 = vunpack.c.l.b16 %v949
    %v999 = vunpack.c.h.b16 %v949
    %v1000 = vunpack.c.l.b16 %v950
    %v1001 = vunpack.c.h.b16 %v950
    %v1002 = vunpack.c.l.b16 %v951
    %v1003 = vunpack.c.h.b16 %v951
    %v1004 = vunpack.c.l.b16 %v952
    %v1005 = vunpack.c.h.b16 %v952
    %v1006 = vunpack.c.l.b16 %v953
    %v1007 = vunpack.c.h.b16 %v953
    %v1008 = vunpack.c.l.b16 %v954
    %v1009 = vunpack.c.h.b16 %v954
    %v1010 = vunpack.c.l.b16 %v955
    %v1011 = vunpack.c.h.b16 %v955
    %v1012 = vunpack.c.l.b16 %v956
    %v1013 = vunpack.c.h.b16 %v956
    %v1014 = vunpack.c.l.b16 %v957
    %v1015 = vunpack.c.h.b16 %v957
    %v1016 = vunpack.c.l.b16 %v958
    %v1017 = vunpack.c.h.b16 %v958
    %v1018 = vpack.c.b16 %v988, %v986
    %v1019 = vpack.c.b16 %v989, %v987
    %v1020 = vpack.c.b16 %v992, %v990
    %v1021 = vpack.c.b16 %v993, %v991
    %v1022 = vpack.c.b16 %v996, %v994
    %v1023 = vpack.c.b16 %v997, %v995
    %v1024 = vpack.c.b16 %v1000, %v998
    %v1025 = vpack.c.b16 %v1001, %v999
    %v1026 = vpack.c.b16 %v1004, %v1002
    %v1027 = vpack.c.b16 %v1005, %v1003
    %v1028 = vpack.c.b16 %v1008, %v1006
    %v1029 = vpack.c.b16 %v1009, %v1007
    %v1030 = vpack.c.b16 %v1012, %v1010
    %v1031 = vpack.c.b16 %v1013, %v1011
    %v1032 = vpack.c.b16 %v1016, %v1014
    %v1033 = vpack.c.b16 %v1017, %v1015
    %1050 = vmatpush.bf16.msra.mxu0 %v1032
    %1051 = vmatpush.bf16.msra.mxu0 %v1030
    %1052 = vmatpush.bf16.msra.mxu0 %v1028
    %1053 = vmatpush.bf16.msra.mxu0 %v1026
    %1054 = vmatpush.bf16.msra.mxu0 %v1024
    %1055 = vmatpush.bf16.msra.mxu0 %v1022
    %1056 = vmatpush.bf16.msra.mxu0 %v1020
    %1057 = vmatpush.bf16.msra.mxu0 %v1018
    %1058 = vmatmul.bf16.gmra.mxu0 %v965
    %v1059 = vpop.f32.mrf.mxu0
    %v1060 = vadd.f32 0.0, %v1059
    %v1061 = vpop.f32.mrf.mxu0
    %v1062 = vadd.f32 0.0, %v1061
    %1063 = vmatmul.bf16.gmra.mxu0 %v967
    %v1064 = vpop.f32.mrf.mxu0
    %v1065 = vadd.f32 0.0, %v1064
    %v1066 = vpop.f32.mrf.mxu0
    %v1067 = vadd.f32 0.0, %v1066
    %1068 = vdwg.mxu0
    %1069 = vmatpush.bf16.msra.mxu0 %v1033
    %1070 = vmatpush.bf16.msra.mxu0 %v1031
    %1071 = vmatpush.bf16.msra.mxu0 %v1029
    %1072 = vmatpush.bf16.msra.mxu0 %v1027
    %1073 = vmatpush.bf16.msra.mxu0 %v1025
    %1074 = vmatpush.bf16.msra.mxu0 %v1023
    %1075 = vmatpush.bf16.msra.mxu0 %v1021
    %1076 = vmatpush.bf16.msra.mxu0 %v1019
    %1077 = vmatmul.bf16.gmra.mxu0 %v965
    %v1078 = vpop.f32.mrf.mxu0
    %v1079 = vadd.f32 0.0, %v1078
    %v1080 = vpop.f32.mrf.mxu0
    %v1081 = vadd.f32 0.0, %v1080
    %1082 = vmatmul.bf16.gmra.mxu0 %v967
    %v1083 = vpop.f32.mrf.mxu0
    %v1084 = vadd.f32 0.0, %v1083
    %v1085 = vpop.f32.mrf.mxu0
    %v1086 = vadd.f32 0.0, %v1085
    %1087 = vdwg.mxu0
    %v1088 = vadd.f32 %v914, %v1060
    %v1089 = vadd.f32 %v933, %v1079
    %v1090 = vadd.f32 %v916, %v1062
    %v1091 = vadd.f32 %v935, %v1081
    %v1092 = vadd.f32 %v919, %v1065
    %v1093 = vadd.f32 %v938, %v1084
    %v1094 = vadd.f32 %v921, %v1067
    %v1095 = vadd.f32 %v940, %v1086
    %s1096 = scalar_lea.vmem %s2, 384
    %v1097 = vld [vmem:[%s1096] sm:$0xff]
    %v1098 = vld [vmem:[%s1096 + $0x8] sm:$0xff]
    %v1099 = vld [vmem:[%s1096 + $0x10] sm:$0xff]
    %v1100 = vld [vmem:[%s1096 + $0x18] sm:$0xff]
    %v1101 = vld [vmem:[%s1096 + $0x20] sm:$0xff]
    %v1102 = vld [vmem:[%s1096 + $0x28] sm:$0xff]
    %v1103 = vld [vmem:[%s1096 + $0x30] sm:$0xff]
    %v1104 = vld [vmem:[%s1096 + $0x38] sm:$0xff]
    %v1105 = vld [vmem:[%s1096 + $0x40] sm:$0xff]
    %v1106 = vld [vmem:[%s1096 + $0x48] sm:$0xff]
    %v1107 = vld [vmem:[%s1096 + $0x50] sm:$0xff]
    %v1108 = vld [vmem:[%s1096 + $0x58] sm:$0xff]
    %v1109 = vld [vmem:[%s1096 + $0x60] sm:$0xff]
    %v1110 = vld [vmem:[%s1096 + $0x68] sm:$0xff]
    %v1111 = vld [vmem:[%s1096 + $0x70] sm:$0xff]
    %v1112 = vld [vmem:[%s1096 + $0x78] sm:$0xff]
    %vm1113 = vsmask.f32 6400
    %v1114 = vrot.slane %v685, 1
    %v1115 = vrot.slane %v687, 2
    %v1116 = vor.u32 %v1114, %v1115
    %v1117 = vrot.slane %v696, 1
    %v1118 = vrot.slane %v692, 2
    %v1119 = vor.u32 %v1117, %v1118
    %v1120 = vsel %vm1113, %v1116, %v1119
    %v1121 = vshrl.u32 %v665, 16
    %v1123 = vrot.slane %v1121, 1
    %v1124 = vrot.slane %v700, 2
    %v1125 = vor.u32 %v1123, %v1124
    %v1126 = vsel %vm1113, %v1119, %v1125
    %v1145 = vunpack.c.l.b16 %v1097
    %v1146 = vunpack.c.h.b16 %v1097
    %v1147 = vunpack.c.l.b16 %v1098
    %v1148 = vunpack.c.h.b16 %v1098
    %v1149 = vunpack.c.l.b16 %v1099
    %v1150 = vunpack.c.h.b16 %v1099
    %v1151 = vunpack.c.l.b16 %v1100
    %v1152 = vunpack.c.h.b16 %v1100
    %v1153 = vunpack.c.l.b16 %v1101
    %v1154 = vunpack.c.h.b16 %v1101
    %v1155 = vunpack.c.l.b16 %v1102
    %v1156 = vunpack.c.h.b16 %v1102
    %v1157 = vunpack.c.l.b16 %v1103
    %v1158 = vunpack.c.h.b16 %v1103
    %v1159 = vunpack.c.l.b16 %v1104
    %v1160 = vunpack.c.h.b16 %v1104
    %v1161 = vunpack.c.l.b16 %v1105
    %v1162 = vunpack.c.h.b16 %v1105
    %v1163 = vunpack.c.l.b16 %v1106
    %v1164 = vunpack.c.h.b16 %v1106
    %v1165 = vunpack.c.l.b16 %v1107
    %v1166 = vunpack.c.h.b16 %v1107
    %v1167 = vunpack.c.l.b16 %v1108
    %v1168 = vunpack.c.h.b16 %v1108
    %v1169 = vunpack.c.l.b16 %v1109
    %v1170 = vunpack.c.h.b16 %v1109
    %v1171 = vunpack.c.l.b16 %v1110
    %v1172 = vunpack.c.h.b16 %v1110
    %v1173 = vunpack.c.l.b16 %v1111
    %v1174 = vunpack.c.h.b16 %v1111
    %v1175 = vunpack.c.l.b16 %v1112
    %v1176 = vunpack.c.h.b16 %v1112
    %v1177 = vpack.c.b16 %v1147, %v1145
    %v1178 = vpack.c.b16 %v1148, %v1146
    %v1179 = vpack.c.b16 %v1151, %v1149
    %v1180 = vpack.c.b16 %v1152, %v1150
    %v1181 = vpack.c.b16 %v1155, %v1153
    %v1182 = vpack.c.b16 %v1156, %v1154
    %v1183 = vpack.c.b16 %v1159, %v1157
    %v1184 = vpack.c.b16 %v1160, %v1158
    %v1185 = vpack.c.b16 %v1163, %v1161
    %v1186 = vpack.c.b16 %v1164, %v1162
    %v1187 = vpack.c.b16 %v1167, %v1165
    %v1188 = vpack.c.b16 %v1168, %v1166
    %v1189 = vpack.c.b16 %v1171, %v1169
    %v1190 = vpack.c.b16 %v1172, %v1170
    %v1191 = vpack.c.b16 %v1175, %v1173
    %v1192 = vpack.c.b16 %v1176, %v1174
    %1209 = vmatpush.bf16.msra.mxu0 %v1191
    %1210 = vmatpush.bf16.msra.mxu0 %v1189
    %1211 = vmatpush.bf16.msra.mxu0 %v1187
    %1212 = vmatpush.bf16.msra.mxu0 %v1185
    %1213 = vmatpush.bf16.msra.mxu0 %v1183
    %1214 = vmatpush.bf16.msra.mxu0 %v1181
    %1215 = vmatpush.bf16.msra.mxu0 %v1179
    %1216 = vmatpush.bf16.msra.mxu0 %v1177
    %1217 = vmatmul.bf16.gmra.mxu0 %v1120
    %v1218 = vpop.f32.mrf.mxu0
    %v1219 = vadd.f32 0.0, %v1218
    %v1220 = vpop.f32.mrf.mxu0
    %v1221 = vadd.f32 0.0, %v1220
    %1222 = vmatmul.bf16.gmra.mxu0 %v1126
    %v1223 = vpop.f32.mrf.mxu0
    %v1224 = vadd.f32 0.0, %v1223
    %v1225 = vpop.f32.mrf.mxu0
    %v1226 = vadd.f32 0.0, %v1225
    %1227 = vdwg.mxu0
    %1228 = vmatpush.bf16.msra.mxu0 %v1192
    %1229 = vmatpush.bf16.msra.mxu0 %v1190
    %1230 = vmatpush.bf16.msra.mxu0 %v1188
    %1231 = vmatpush.bf16.msra.mxu0 %v1186
    %1232 = vmatpush.bf16.msra.mxu0 %v1184
    %1233 = vmatpush.bf16.msra.mxu0 %v1182
    %1234 = vmatpush.bf16.msra.mxu0 %v1180
    %1235 = vmatpush.bf16.msra.mxu0 %v1178
    %1236 = vmatmul.bf16.gmra.mxu0 %v1120
    %v1237 = vpop.f32.mrf.mxu0
    %v1238 = vadd.f32 0.0, %v1237
    %v1239 = vpop.f32.mrf.mxu0
    %v1240 = vadd.f32 0.0, %v1239
    %1241 = vmatmul.bf16.gmra.mxu0 %v1126
    %v1242 = vpop.f32.mrf.mxu0
    %v1243 = vadd.f32 0.0, %v1242
    %v1244 = vpop.f32.mrf.mxu0
    %v1245 = vadd.f32 0.0, %v1244
    %1246 = vdwg.mxu0
    %v1247 = vadd.f32 %v1088, %v1219
    %v1248 = vadd.f32 %v1089, %v1238
    %v1249 = vadd.f32 %v1090, %v1221
    %v1250 = vadd.f32 %v1091, %v1240
    %v1251 = vadd.f32 %v1092, %v1224
    %v1252 = vadd.f32 %v1093, %v1243
    %v1253 = vadd.f32 %v1094, %v1226
    %v1254 = vadd.f32 %v1095, %v1245
    %s1255 = scalar_lea.vmem %s2, 512
    %v1256 = vld [vmem:[%s1255] sm:$0xff]
    %v1257 = vld [vmem:[%s1255 + $0x8] sm:$0xff]
    %v1258 = vld [vmem:[%s1255 + $0x10] sm:$0xff]
    %v1259 = vld [vmem:[%s1255 + $0x18] sm:$0xff]
    %v1260 = vld [vmem:[%s1255 + $0x20] sm:$0xff]
    %v1261 = vld [vmem:[%s1255 + $0x28] sm:$0xff]
    %v1262 = vld [vmem:[%s1255 + $0x30] sm:$0xff]
    %v1263 = vld [vmem:[%s1255 + $0x38] sm:$0xff]
    %v1264 = vld [vmem:[%s1255 + $0x40] sm:$0xff]
    %v1265 = vld [vmem:[%s1255 + $0x48] sm:$0xff]
    %v1266 = vld [vmem:[%s1255 + $0x50] sm:$0xff]
    %v1267 = vld [vmem:[%s1255 + $0x58] sm:$0xff]
    %v1268 = vld [vmem:[%s1255 + $0x60] sm:$0xff]
    %v1269 = vld [vmem:[%s1255 + $0x68] sm:$0xff]
    %v1270 = vld [vmem:[%s1255 + $0x70] sm:$0xff]
    %v1271 = vld [vmem:[%s1255 + $0x78] sm:$0xff]
    %vm1272 = vcmask 1045504
    %v1273 = vrot.slane %v647, 2
    %v1274 = vrot.slane %v648, 2
    %v1275 = vsel %vm1272, %v1273, %v1274
    %v1276 = vrot.slane %v665, 2
    %v1277 = vsel %vm1272, %v1274, %v1276
    %v1296 = vunpack.c.l.b16 %v1256
    %v1297 = vunpack.c.h.b16 %v1256
    %v1298 = vunpack.c.l.b16 %v1257
    %v1299 = vunpack.c.h.b16 %v1257
    %v1300 = vunpack.c.l.b16 %v1258
    %v1301 = vunpack.c.h.b16 %v1258
    %v1302 = vunpack.c.l.b16 %v1259
    %v1303 = vunpack.c.h.b16 %v1259
    %v1304 = vunpack.c.l.b16 %v1260
    %v1305 = vunpack.c.h.b16 %v1260
    %v1306 = vunpack.c.l.b16 %v1261
    %v1307 = vunpack.c.h.b16 %v1261
    %v1308 = vunpack.c.l.b16 %v1262
    %v1309 = vunpack.c.h.b16 %v1262
    %v1310 = vunpack.c.l.b16 %v1263
    %v1311 = vunpack.c.h.b16 %v1263
    %v1312 = vunpack.c.l.b16 %v1264
    %v1313 = vunpack.c.h.b16 %v1264
    %v1314 = vunpack.c.l.b16 %v1265
    %v1315 = vunpack.c.h.b16 %v1265
    %v1316 = vunpack.c.l.b16 %v1266
    %v1317 = vunpack.c.h.b16 %v1266
    %v1318 = vunpack.c.l.b16 %v1267
    %v1319 = vunpack.c.h.b16 %v1267
    %v1320 = vunpack.c.l.b16 %v1268
    %v1321 = vunpack.c.h.b16 %v1268
    %v1322 = vunpack.c.l.b16 %v1269
    %v1323 = vunpack.c.h.b16 %v1269
    %v1324 = vunpack.c.l.b16 %v1270
    %v1325 = vunpack.c.h.b16 %v1270
    %v1326 = vunpack.c.l.b16 %v1271
    %v1327 = vunpack.c.h.b16 %v1271
    %v1328 = vpack.c.b16 %v1298, %v1296
    %v1329 = vpack.c.b16 %v1299, %v1297
    %v1330 = vpack.c.b16 %v1302, %v1300
    %v1331 = vpack.c.b16 %v1303, %v1301
    %v1332 = vpack.c.b16 %v1306, %v1304
    %v1333 = vpack.c.b16 %v1307, %v1305
    %v1334 = vpack.c.b16 %v1310, %v1308
    %v1335 = vpack.c.b16 %v1311, %v1309
    %v1336 = vpack.c.b16 %v1314, %v1312
    %v1337 = vpack.c.b16 %v1315, %v1313
    %v1338 = vpack.c.b16 %v1318, %v1316
    %v1339 = vpack.c.b16 %v1319, %v1317
    %v1340 = vpack.c.b16 %v1322, %v1320
    %v1341 = vpack.c.b16 %v1323, %v1321
    %v1342 = vpack.c.b16 %v1326, %v1324
    %v1343 = vpack.c.b16 %v1327, %v1325
    %1360 = vmatpush.bf16.msra.mxu0 %v1342
    %1361 = vmatpush.bf16.msra.mxu0 %v1340
    %1362 = vmatpush.bf16.msra.mxu0 %v1338
    %1363 = vmatpush.bf16.msra.mxu0 %v1336
    %1364 = vmatpush.bf16.msra.mxu0 %v1334
    %1365 = vmatpush.bf16.msra.mxu0 %v1332
    %1366 = vmatpush.bf16.msra.mxu0 %v1330
    %1367 = vmatpush.bf16.msra.mxu0 %v1328
    %1368 = vmatmul.bf16.gmra.mxu0 %v1275
    %v1369 = vpop.f32.mrf.mxu0
    %v1370 = vadd.f32 0.0, %v1369
    %v1371 = vpop.f32.mrf.mxu0
    %v1372 = vadd.f32 0.0, %v1371
    %1373 = vmatmul.bf16.gmra.mxu0 %v1277
    %v1374 = vpop.f32.mrf.mxu0
    %v1375 = vadd.f32 0.0, %v1374
    %v1376 = vpop.f32.mrf.mxu0
    %v1377 = vadd.f32 0.0, %v1376
    %1378 = vdwg.mxu0
    %1379 = vmatpush.bf16.msra.mxu0 %v1343
    %1380 = vmatpush.bf16.msra.mxu0 %v1341
    %1381 = vmatpush.bf16.msra.mxu0 %v1339
    %1382 = vmatpush.bf16.msra.mxu0 %v1337
    %1383 = vmatpush.bf16.msra.mxu0 %v1335
    %1384 = vmatpush.bf16.msra.mxu0 %v1333
    %1385 = vmatpush.bf16.msra.mxu0 %v1331
    %1386 = vmatpush.bf16.msra.mxu0 %v1329
    %1387 = vmatmul.bf16.gmra.mxu0 %v1275
    %v1388 = vpop.f32.mrf.mxu0
    %v1389 = vadd.f32 0.0, %v1388
    %v1390 = vpop.f32.mrf.mxu0
    %v1391 = vadd.f32 0.0, %v1390
    %1392 = vmatmul.bf16.gmra.mxu0 %v1277
    %v1393 = vpop.f32.mrf.mxu0
    %v1394 = vadd.f32 0.0, %v1393
    %v1395 = vpop.f32.mrf.mxu0
    %v1396 = vadd.f32 0.0, %v1395
    %1397 = vdwg.mxu0
    %v1398 = vadd.f32 %v1247, %v1370
    %v1399 = vadd.f32 %v1248, %v1389
    %v1400 = vadd.f32 %v1249, %v1372
    %v1401 = vadd.f32 %v1250, %v1391
    %v1402 = vadd.f32 %v1251, %v1375
    %v1403 = vadd.f32 %v1252, %v1394
    %v1404 = vadd.f32 %v1253, %v1377
    %v1405 = vadd.f32 %v1254, %v1396
    %v1407 = vperm.slane %v147, 0
    %v1408 = vperm.slane %v147, 1
    %v1411 = vadd.f32 %v1398, %v1407
    %v1412 = vadd.f32 %v1399, %v1408
    %v1413 = vadd.f32 %v1400, %v1407
    %v1414 = vadd.f32 %v1401, %v1408
    %v1415 = vadd.f32 %v1402, %v1407
    %v1416 = vadd.f32 %v1403, %v1408
    %v1417 = vadd.f32 %v1404, %v1407
    %v1418 = vadd.f32 %v1405, %v1408
    %v1419 = vmax.f32 %v1411, 0.0
    %v1420 = vmax.f32 %v1412, 0.0
    %v1421 = vmax.f32 %v1413, 0.0
    %v1422 = vmax.f32 %v1414, 0.0
    %v1423 = vmax.f32 %v1415, 0.0
    %v1424 = vmax.f32 %v1416, 0.0
    %v1425 = vmax.f32 %v1417, 0.0
    %v1426 = vmax.f32 %v1418, 0.0
    %v1427 = vmax.f32 %v1419, %v1420
    %v1428 = vmax.f32 %v1421, %v1422
    %v1429 = vmax.f32 %v1423, %v1424
    %v1430 = vmax.f32 %v1425, %v1426
    %v1431 = vld [vmem:[#allocation6] sm:$0xff]
    %v1432 = vld [vmem:[#allocation6 + $0x8] sm:$0xff]
    %vm1433 = vcmask 261120
    %v1435 = vsel %vm1433, %v1431, 0
    %v1438 = vsel %vm1433, %v1432, 0
    %1440 = vmatpush.msra.mxu0 0.0
    %1441 = vmatpush.msra.mxu0 0.0
    %1442 = vmatpush.msra.mxu0 0.0
    %1443 = vmatpush.msra.mxu0 0.0
    %1444 = vmatpush.msra.mxu0 0.0
    %1445 = vmatpush.msra.mxu0 0.0
    %1446 = vmatpush.msra.mxu0 0.0
    %1447 = vmatpush.msra.mxu0 0.0
    %1448 = vmatpush.msra.mxu0 0.0
    %1449 = vmatpush.msra.mxu0 0.0
    %1450 = vmatpush.msra.mxu0 0.0
    %1451 = vmatpush.msra.mxu0 0.0
    %1452 = vmatpush.msra.mxu0 %v1430
    %1453 = vmatpush.msra.mxu0 %v1429
    %1454 = vmatpush.msra.mxu0 %v1428
    %1455 = vmatpush.msra.mxu0 %v1427
    %1456 = vmatmul.f32.gmra.mxu0 %v1435
    %v1457 = vpop.f32.mrf.mxu0
    %v1458 = vadd.f32 0.0, %v1457
    %1459 = vmatmul.f32.gmra.mxu0 %v1438
    %v1460 = vpop.f32.mrf.mxu0
    %v1461 = vadd.f32 0.0, %v1460
    %1462 = vdwg.mxu0
    %v1463 = vld [vmem:[#allocation7] sm:$0xff]
    %v1464 = vld [vmem:[#allocation7 + $0x8] sm:$0xff]
    %v1466 = vsel %vm1433, %v1463, 0
    %v1469 = vsel %vm1433, %v1464, 0
    %1471 = vmatpush.msra.mxu0 0.0
    %1472 = vmatpush.msra.mxu0 0.0
    %1473 = vmatpush.msra.mxu0 0.0
    %1474 = vmatpush.msra.mxu0 0.0
    %1475 = vmatpush.msra.mxu0 0.0
    %1476 = vmatpush.msra.mxu0 0.0
    %1477 = vmatpush.msra.mxu0 0.0
    %1478 = vmatpush.msra.mxu0 0.0
    %1479 = vmatpush.msra.mxu0 0.0
    %1480 = vmatpush.msra.mxu0 0.0
    %1481 = vmatpush.msra.mxu0 0.0
    %1482 = vmatpush.msra.mxu0 0.0
    %1483 = vmatpush.msra.mxu0 %v1430
    %1484 = vmatpush.msra.mxu0 %v1429
    %1485 = vmatpush.msra.mxu0 %v1428
    %1486 = vmatpush.msra.mxu0 %v1427
    %1487 = vmatmul.f32.gmra.mxu0 %v1466
    %v1488 = vpop.f32.mrf.mxu0
    %v1489 = vadd.f32 0.0, %v1488
    %1490 = vmatmul.f32.gmra.mxu0 %v1469
    %v1491 = vpop.f32.mrf.mxu0
    %v1492 = vadd.f32 0.0, %v1491
    %1493 = vdwg.mxu0
    %v1494 = vmax.f32 %v1458, %v1489
    %v1495 = vmax.f32 %v1461, %v1492
    %v1496 = vpack.c.bf16 %v1495, %v1494
    %v1497 = vld [vmem:[#allocation9] sm:$0xff]
    %v1498 = vld [vmem:[#allocation9 + $0x8] sm:$0xff]
    %v1499 = vld [vmem:[#allocation9 + $0x10] sm:$0xff]
    %v1500 = vld [vmem:[#allocation9 + $0x18] sm:$0xff]
    %v1501 = vld [vmem:[#allocation9 + $0x20] sm:$0xff]
    %v1502 = vld [vmem:[#allocation9 + $0x28] sm:$0xff]
    %v1503 = vld [vmem:[#allocation9 + $0x30] sm:$0xff]
    %v1504 = vld [vmem:[#allocation9 + $0x38] sm:$0xff]
    %v1505 = vld [vmem:[#allocation9 + $0x40] sm:$0xff]
    %v1506 = vld [vmem:[#allocation9 + $0x48] sm:$0xff]
    %v1507 = vld [vmem:[#allocation9 + $0x50] sm:$0xff]
    %v1508 = vld [vmem:[#allocation9 + $0x58] sm:$0xff]
    %v1509 = vld [vmem:[#allocation9 + $0x60] sm:$0xff]
    %v1510 = vld [vmem:[#allocation9 + $0x68] sm:$0xff]
    %v1511 = vld [vmem:[#allocation9 + $0x70] sm:$0xff]
    %v1512 = vld [vmem:[#allocation9 + $0x78] sm:$0xff]
    %v1513 = vld [vmem:[#allocation9 + $0x80] sm:$0xff]
    %v1514 = vld [vmem:[#allocation9 + $0x88] sm:$0xff]
    %v1515 = vld [vmem:[#allocation9 + $0x90] sm:$0xff]
    %v1516 = vld [vmem:[#allocation9 + $0x98] sm:$0xff]
    %v1517 = vld [vmem:[#allocation9 + $0xa0] sm:$0xff]
    %v1518 = vld [vmem:[#allocation9 + $0xa8] sm:$0xff]
    %v1519 = vld [vmem:[#allocation9 + $0xb0] sm:$0xff]
    %v1520 = vld [vmem:[#allocation9 + $0xb8] sm:$0xff]
    %v1521 = vld [vmem:[#allocation9 + $0xc0] sm:$0xff]
    %v1522 = vld [vmem:[#allocation9 + $0xc8] sm:$0xff]
    %v1523 = vld [vmem:[#allocation9 + $0xd0] sm:$0xff]
    %v1524 = vld [vmem:[#allocation9 + $0xd8] sm:$0xff]
    %v1525 = vld [vmem:[#allocation9 + $0xe0] sm:$0xff]
    %v1526 = vld [vmem:[#allocation9 + $0xe8] sm:$0xff]
    %v1527 = vld [vmem:[#allocation9 + $0xf0] sm:$0xff]
    %v1528 = vld [vmem:[#allocation9 + $0xf8] sm:$0xff]
    %v1561 = vunpack.c.l.b16 %v1497
    %v1562 = vunpack.c.h.b16 %v1497
    %v1563 = vunpack.c.l.b16 %v1498
    %v1564 = vunpack.c.h.b16 %v1498
    %v1565 = vunpack.c.l.b16 %v1499
    %v1566 = vunpack.c.h.b16 %v1499
    %v1567 = vunpack.c.l.b16 %v1500
    %v1568 = vunpack.c.h.b16 %v1500
    %v1569 = vunpack.c.l.b16 %v1501
    %v1570 = vunpack.c.h.b16 %v1501
    %v1571 = vunpack.c.l.b16 %v1502
    %v1572 = vunpack.c.h.b16 %v1502
    %v1573 = vunpack.c.l.b16 %v1503
    %v1574 = vunpack.c.h.b16 %v1503
    %v1575 = vunpack.c.l.b16 %v1504
    %v1576 = vunpack.c.h.b16 %v1504
    %v1577 = vunpack.c.l.b16 %v1505
    %v1578 = vunpack.c.h.b16 %v1505
    %v1579 = vunpack.c.l.b16 %v1506
    %v1580 = vunpack.c.h.b16 %v1506
    %v1581 = vunpack.c.l.b16 %v1507
    %v1582 = vunpack.c.h.b16 %v1507
    %v1583 = vunpack.c.l.b16 %v1508
    %v1584 = vunpack.c.h.b16 %v1508
    %v1585 = vunpack.c.l.b16 %v1509
    %v1586 = vunpack.c.h.b16 %v1509
    %v1587 = vunpack.c.l.b16 %v1510
    %v1588 = vunpack.c.h.b16 %v1510
    %v1589 = vunpack.c.l.b16 %v1511
    %v1590 = vunpack.c.h.b16 %v1511
    %v1591 = vunpack.c.l.b16 %v1512
    %v1592 = vunpack.c.h.b16 %v1512
    %v1593 = vunpack.c.l.b16 %v1513
    %v1594 = vunpack.c.h.b16 %v1513
    %v1595 = vunpack.c.l.b16 %v1514
    %v1596 = vunpack.c.h.b16 %v1514
    %v1597 = vunpack.c.l.b16 %v1515
    %v1598 = vunpack.c.h.b16 %v1515
    %v1599 = vunpack.c.l.b16 %v1516
    %v1600 = vunpack.c.h.b16 %v1516
    %v1601 = vunpack.c.l.b16 %v1517
    %v1602 = vunpack.c.h.b16 %v1517
    %v1603 = vunpack.c.l.b16 %v1518
    %v1604 = vunpack.c.h.b16 %v1518
    %v1605 = vunpack.c.l.b16 %v1519
    %v1606 = vunpack.c.h.b16 %v1519
    %v1607 = vunpack.c.l.b16 %v1520
    %v1608 = vunpack.c.h.b16 %v1520
    %v1609 = vunpack.c.l.b16 %v1521
    %v1610 = vunpack.c.h.b16 %v1521
    %v1611 = vunpack.c.l.b16 %v1522
    %v1612 = vunpack.c.h.b16 %v1522
    %v1613 = vunpack.c.l.b16 %v1523
    %v1614 = vunpack.c.h.b16 %v1523
    %v1615 = vunpack.c.l.b16 %v1524
    %v1616 = vunpack.c.h.b16 %v1524
    %v1617 = vunpack.c.l.b16 %v1525
    %v1618 = vunpack.c.h.b16 %v1525
    %v1619 = vunpack.c.l.b16 %v1526
    %v1620 = vunpack.c.h.b16 %v1526
    %v1621 = vunpack.c.l.b16 %v1527
    %v1622 = vunpack.c.h.b16 %v1527
    %v1623 = vunpack.c.l.b16 %v1528
    %v1624 = vunpack.c.h.b16 %v1528
    %v1625 = vpack.c.b16 %v1565, %v1561
    %v1626 = vpack.c.b16 %v1566, %v1562
    %v1627 = vpack.c.b16 %v1567, %v1563
    %v1628 = vpack.c.b16 %v1568, %v1564
    %v1629 = vpack.c.b16 %v1573, %v1569
    %v1630 = vpack.c.b16 %v1574, %v1570
    %v1631 = vpack.c.b16 %v1575, %v1571
    %v1632 = vpack.c.b16 %v1576, %v1572
    %v1633 = vpack.c.b16 %v1581, %v1577
    %v1634 = vpack.c.b16 %v1582, %v1578
    %v1635 = vpack.c.b16 %v1583, %v1579
    %v1636 = vpack.c.b16 %v1584, %v1580
    %v1637 = vpack.c.b16 %v1589, %v1585
    %v1638 = vpack.c.b16 %v1590, %v1586
    %v1639 = vpack.c.b16 %v1591, %v1587
    %v1640 = vpack.c.b16 %v1592, %v1588
    %v1641 = vpack.c.b16 %v1597, %v1593
    %v1642 = vpack.c.b16 %v1598, %v1594
    %v1643 = vpack.c.b16 %v1599, %v1595
    %v1644 = vpack.c.b16 %v1600, %v1596
    %v1645 = vpack.c.b16 %v1605, %v1601
    %v1646 = vpack.c.b16 %v1606, %v1602
    %v1647 = vpack.c.b16 %v1607, %v1603
    %v1648 = vpack.c.b16 %v1608, %v1604
    %v1649 = vpack.c.b16 %v1613, %v1609
    %v1650 = vpack.c.b16 %v1614, %v1610
    %v1651 = vpack.c.b16 %v1615, %v1611
    %v1652 = vpack.c.b16 %v1616, %v1612
    %v1653 = vpack.c.b16 %v1621, %v1617
    %v1654 = vpack.c.b16 %v1622, %v1618
    %v1655 = vpack.c.b16 %v1623, %v1619
    %v1656 = vpack.c.b16 %v1624, %v1620
    %1689 = vmatpush.bf16.msra.mxu0 %v1653
    %1690 = vmatpush.bf16.msra.mxu0 %v1649
    %1691 = vmatpush.bf16.msra.mxu0 %v1645
    %1692 = vmatpush.bf16.msra.mxu0 %v1641
    %1693 = vmatpush.bf16.msra.mxu0 %v1637
    %1694 = vmatpush.bf16.msra.mxu0 %v1633
    %1695 = vmatpush.bf16.msra.mxu0 %v1629
    %1696 = vmatpush.bf16.msra.mxu0 %v1625
    %1697 = vmatmul.bf16.gmra.mxu0 %v1496
    %v1698 = vpop.f32.mrf.mxu0
    %v1699 = vadd.f32 0.0, %v1698
    %v1700 = vpop.f32.mrf.mxu0
    %v1701 = vadd.f32 0.0, %v1700
    %1702 = vdwg.mxu0
    %1703 = vmatpush.bf16.msra.mxu0 %v1654
    %1704 = vmatpush.bf16.msra.mxu0 %v1650
    %1705 = vmatpush.bf16.msra.mxu0 %v1646
    %1706 = vmatpush.bf16.msra.mxu0 %v1642
    %1707 = vmatpush.bf16.msra.mxu0 %v1638
    %1708 = vmatpush.bf16.msra.mxu0 %v1634
    %1709 = vmatpush.bf16.msra.mxu0 %v1630
    %1710 = vmatpush.bf16.msra.mxu0 %v1626
    %1711 = vmatmul.bf16.gmra.mxu0 %v1496
    %v1712 = vpop.f32.mrf.mxu0
    %v1713 = vadd.f32 0.0, %v1712
    %v1714 = vpop.f32.mrf.mxu0
    %v1715 = vadd.f32 0.0, %v1714
    %1716 = vdwg.mxu0
    %1717 = vmatpush.bf16.msra.mxu0 %v1655
    %1718 = vmatpush.bf16.msra.mxu0 %v1651
    %1719 = vmatpush.bf16.msra.mxu0 %v1647
    %1720 = vmatpush.bf16.msra.mxu0 %v1643
    %1721 = vmatpush.bf16.msra.mxu0 %v1639
    %1722 = vmatpush.bf16.msra.mxu0 %v1635
    %1723 = vmatpush.bf16.msra.mxu0 %v1631
    %1724 = vmatpush.bf16.msra.mxu0 %v1627
    %1725 = vmatmul.bf16.gmra.mxu0 %v1496
    %v1726 = vpop.f32.mrf.mxu0
    %v1727 = vadd.f32 0.0, %v1726
    %v1728 = vpop.f32.mrf.mxu0
    %v1729 = vadd.f32 0.0, %v1728
    %1730 = vdwg.mxu0
    %1731 = vmatpush.bf16.msra.mxu0 %v1656
    %1732 = vmatpush.bf16.msra.mxu0 %v1652
    %1733 = vmatpush.bf16.msra.mxu0 %v1648
    %1734 = vmatpush.bf16.msra.mxu0 %v1644
    %1735 = vmatpush.bf16.msra.mxu0 %v1640
    %1736 = vmatpush.bf16.msra.mxu0 %v1636
    %1737 = vmatpush.bf16.msra.mxu0 %v1632
    %1738 = vmatpush.bf16.msra.mxu0 %v1628
    %1739 = vmatmul.bf16.gmra.mxu0 %v1496
    %v1740 = vpop.f32.mrf.mxu0
    %v1741 = vadd.f32 0.0, %v1740
    %v1742 = vpop.f32.mrf.mxu0
    %v1743 = vadd.f32 0.0, %v1742
    %1744 = vdwg.mxu0
    %v1745 = vld [vmem:[%s7] sm:$0xff]
    %v1746 = vld [vmem:[%s7 + $0x8] sm:$0xff]
    %vm1747 = vcmask 130048
    %v1749 = vsel %vm1747, %v1745, 0
    %v1752 = vsel %vm1747, %v1746, 0
    %1754 = vmatpush.msra.mxu0 0.0
    %1755 = vmatpush.msra.mxu0 0.0
    %1756 = vmatpush.msra.mxu0 0.0
    %1757 = vmatpush.msra.mxu0 0.0
    %1758 = vmatpush.msra.mxu0 0.0
    %1759 = vmatpush.msra.mxu0 0.0
    %1760 = vmatpush.msra.mxu0 0.0
    %1761 = vmatpush.msra.mxu0 0.0
    %1762 = vmatpush.msra.mxu0 0.0
    %1763 = vmatpush.msra.mxu0 0.0
    %1764 = vmatpush.msra.mxu0 0.0
    %1765 = vmatpush.msra.mxu0 0.0
    %1766 = vmatpush.msra.mxu0 0.0
    %1767 = vmatpush.msra.mxu0 0.0
    %1768 = vmatpush.msra.mxu0 %v1715
    %1769 = vmatpush.msra.mxu0 %v1713
    %1770 = vmatmul.f32.gmra.mxu0 %v1749
    %v1771 = vpop.f32.mrf.mxu0
    %v1772 = vadd.f32 0.0, %v1771
    %1773 = vmatmul.f32.gmra.mxu0 %v1752
    %v1774 = vpop.f32.mrf.mxu0
    %v1775 = vadd.f32 0.0, %v1774
    %1776 = vdwg.mxu0
    %v1777 = vadd.f32 %v1699, %v1772
    %v1778 = vadd.f32 %v1701, %v1775
    %s1779 = scalar_lea.vmem %s7, 16
    %v1780 = vld [vmem:[%s1779] sm:$0xff]
    %v1781 = vld [vmem:[%s1779 + $0x8] sm:$0xff]
    %v1783 = vsel %vm1747, %v1780, 0
    %v1786 = vsel %vm1747, %v1781, 0
    %1788 = vmatpush.msra.mxu0 0.0
    %1789 = vmatpush.msra.mxu0 0.0
    %1790 = vmatpush.msra.mxu0 0.0
    %1791 = vmatpush.msra.mxu0 0.0
    %1792 = vmatpush.msra.mxu0 0.0
    %1793 = vmatpush.msra.mxu0 0.0
    %1794 = vmatpush.msra.mxu0 0.0
    %1795 = vmatpush.msra.mxu0 0.0
    %1796 = vmatpush.msra.mxu0 0.0
    %1797 = vmatpush.msra.mxu0 0.0
    %1798 = vmatpush.msra.mxu0 0.0
    %1799 = vmatpush.msra.mxu0 0.0
    %1800 = vmatpush.msra.mxu0 0.0
    %1801 = vmatpush.msra.mxu0 0.0
    %1802 = vmatpush.msra.mxu0 %v1729
    %1803 = vmatpush.msra.mxu0 %v1727
    %1804 = vmatmul.f32.gmra.mxu0 %v1783
    %v1805 = vpop.f32.mrf.mxu0
    %v1806 = vadd.f32 0.0, %v1805
    %1807 = vmatmul.f32.gmra.mxu0 %v1786
    %v1808 = vpop.f32.mrf.mxu0
    %v1809 = vadd.f32 0.0, %v1808
    %1810 = vdwg.mxu0
    %v1811 = vadd.f32 %v1777, %v1806
    %v1812 = vadd.f32 %v1778, %v1809
    %s1813 = scalar_lea.vmem %s7, 32
    %v1814 = vld [vmem:[%s1813] sm:$0xff]
    %v1815 = vld [vmem:[%s1813 + $0x8] sm:$0xff]
    %v1817 = vsel %vm1747, %v1814, 0
    %v1820 = vsel %vm1747, %v1815, 0
    %1822 = vmatpush.msra.mxu0 0.0
    %1823 = vmatpush.msra.mxu0 0.0
    %1824 = vmatpush.msra.mxu0 0.0
    %1825 = vmatpush.msra.mxu0 0.0
    %1826 = vmatpush.msra.mxu0 0.0
    %1827 = vmatpush.msra.mxu0 0.0
    %1828 = vmatpush.msra.mxu0 0.0
    %1829 = vmatpush.msra.mxu0 0.0
    %1830 = vmatpush.msra.mxu0 0.0
    %1831 = vmatpush.msra.mxu0 0.0
    %1832 = vmatpush.msra.mxu0 0.0
    %1833 = vmatpush.msra.mxu0 0.0
    %1834 = vmatpush.msra.mxu0 0.0
    %1835 = vmatpush.msra.mxu0 0.0
    %1836 = vmatpush.msra.mxu0 %v1743
    %1837 = vmatpush.msra.mxu0 %v1741
    %1838 = vmatmul.f32.gmra.mxu0 %v1817
    %v1839 = vpop.f32.mrf.mxu0
    %v1840 = vadd.f32 0.0, %v1839
    %1841 = vmatmul.f32.gmra.mxu0 %v1820
    %v1842 = vpop.f32.mrf.mxu0
    %v1843 = vadd.f32 0.0, %v1842
    %1844 = vdwg.mxu0
    %v1845 = vadd.f32 %v1811, %v1840
    %v1846 = vadd.f32 %v1812, %v1843
    %v1847 = vadd.f32 %v1845, %v148
    %v1848 = vadd.f32 %v1846, %v148
    %v1849 = vmax.f32 %v1847, 0.0
    %v1850 = vmax.f32 %v1848, 0.0
    %v1851 = vpack.c.bf16 %v1850, %v1849
    %v1852 = vld [vmem:[#allocation10] sm:$0xf]
    %v1853 = vld [vmem:[#allocation10 + $0x4] sm:$0xf]
    %v1854 = vld [vmem:[#allocation10 + $0x8] sm:$0xf]
    %v1855 = vld [vmem:[#allocation10 + $0xc] sm:$0xf]
    %v1856 = vld [vmem:[#allocation10 + $0x10] sm:$0xf]
    %v1857 = vld [vmem:[#allocation10 + $0x14] sm:$0xf]
    %v1858 = vld [vmem:[#allocation10 + $0x18] sm:$0xf]
    %v1859 = vld [vmem:[#allocation10 + $0x1c] sm:$0xf]
    %v1860 = vld [vmem:[#allocation10 + $0x20] sm:$0xf]
    %v1861 = vld [vmem:[#allocation10 + $0x24] sm:$0xf]
    %v1862 = vld [vmem:[#allocation10 + $0x28] sm:$0xf]
    %v1863 = vld [vmem:[#allocation10 + $0x2c] sm:$0xf]
    %v1864 = vld [vmem:[#allocation10 + $0x30] sm:$0xf]
    %v1865 = vld [vmem:[#allocation10 + $0x34] sm:$0xf]
    %v1866 = vld [vmem:[#allocation10 + $0x38] sm:$0xf]
    %v1867 = vld [vmem:[#allocation10 + $0x3c] sm:$0xf]
    %v1884 = vunpack.c.l.b16 %v1852
    %v1885 = vunpack.c.l.b16 %v1853
    %v1886 = vunpack.c.l.b16 %v1854
    %v1887 = vunpack.c.l.b16 %v1855
    %v1888 = vunpack.c.l.b16 %v1856
    %v1889 = vunpack.c.l.b16 %v1857
    %v1890 = vunpack.c.l.b16 %v1858
    %v1891 = vunpack.c.l.b16 %v1859
    %v1892 = vunpack.c.l.b16 %v1860
    %v1893 = vunpack.c.l.b16 %v1861
    %v1894 = vunpack.c.l.b16 %v1862
    %v1895 = vunpack.c.l.b16 %v1863
    %v1896 = vunpack.c.l.b16 %v1864
    %v1897 = vunpack.c.l.b16 %v1865
    %v1898 = vunpack.c.l.b16 %v1866
    %v1899 = vunpack.c.l.b16 %v1867
    %v1900 = vpack.c.b16 %v1885, %v1884
    %v1901 = vpack.c.b16 %v1887, %v1886
    %v1902 = vpack.c.b16 %v1889, %v1888
    %v1903 = vpack.c.b16 %v1891, %v1890
    %v1904 = vpack.c.b16 %v1893, %v1892
    %v1905 = vpack.c.b16 %v1895, %v1894
    %v1906 = vpack.c.b16 %v1897, %v1896
    %v1907 = vpack.c.b16 %v1899, %v1898
    %1916 = vmatpush.bf16.msra.mxu0 %v1907
    %1917 = vmatpush.bf16.msra.mxu0 %v1906
    %1918 = vmatpush.bf16.msra.mxu0 %v1905
    %1919 = vmatpush.bf16.msra.mxu0 %v1904
    %1920 = vmatpush.bf16.msra.mxu0 %v1903
    %1921 = vmatpush.bf16.msra.mxu0 %v1902
    %1922 = vmatpush.bf16.msra.mxu0 %v1901
    %1923 = vmatpush.bf16.msra.mxu0 %v1900
    %1924 = vmatmul.bf16.gmra.mxu0 %v1851
    %v1925 = vpop.f32.mrf.mxu0
    %v1926 = vadd.f32 %v149, %v1925
    %v1927 = vpop.f32.mrf.mxu0
    %v1928 = vadd.f32 %v149, %v1927
    %1929 = vdwg.mxu0
    %v1930 = vmax.f32 %v1926, 0.0
    %v1931 = vmax.f32 %v1928, 0.0
    %v1932 = vpack.c.bf16 %v1931, %v1930
    %s1933 = scalar_lea.vmem [#allocation10], 64
    %v1934 = vld [vmem:[%s1933] sm:$0xf]
    %v1935 = vld [vmem:[%s1933 + $0x4] sm:$0xf]
    %v1936 = vld [vmem:[%s1933 + $0x8] sm:$0xf]
    %v1937 = vld [vmem:[%s1933 + $0xc] sm:$0xf]
    %v1938 = vld [vmem:[%s1933 + $0x10] sm:$0xf]
    %v1939 = vld [vmem:[%s1933 + $0x14] sm:$0xf]
    %v1940 = vld [vmem:[%s1933 + $0x18] sm:$0xf]
    %v1941 = vld [vmem:[%s1933 + $0x1c] sm:$0xf]
    %v1942 = vld [vmem:[%s1933 + $0x20] sm:$0xf]
    %v1943 = vld [vmem:[%s1933 + $0x24] sm:$0xf]
    %v1944 = vld [vmem:[%s1933 + $0x28] sm:$0xf]
    %v1945 = vld [vmem:[%s1933 + $0x2c] sm:$0xf]
    %v1946 = vld [vmem:[%s1933 + $0x30] sm:$0xf]
    %v1947 = vld [vmem:[%s1933 + $0x34] sm:$0xf]
    %v1948 = vld [vmem:[%s1933 + $0x38] sm:$0xf]
    %v1949 = vld [vmem:[%s1933 + $0x3c] sm:$0xf]
    %v1966 = vunpack.c.l.b16 %v1934
    %v1967 = vunpack.c.l.b16 %v1935
    %v1968 = vunpack.c.l.b16 %v1936
    %v1969 = vunpack.c.l.b16 %v1937
    %v1970 = vunpack.c.l.b16 %v1938
    %v1971 = vunpack.c.l.b16 %v1939
    %v1972 = vunpack.c.l.b16 %v1940
    %v1973 = vunpack.c.l.b16 %v1941
    %v1974 = vunpack.c.l.b16 %v1942
    %v1975 = vunpack.c.l.b16 %v1943
    %v1976 = vunpack.c.l.b16 %v1944
    %v1977 = vunpack.c.l.b16 %v1945
    %v1978 = vunpack.c.l.b16 %v1946
    %v1979 = vunpack.c.l.b16 %v1947
    %v1980 = vunpack.c.l.b16 %v1948
    %v1981 = vunpack.c.l.b16 %v1949
    %v1982 = vpack.c.b16 %v1967, %v1966
    %v1983 = vpack.c.b16 %v1969, %v1968
    %v1984 = vpack.c.b16 %v1971, %v1970
    %v1985 = vpack.c.b16 %v1973, %v1972
    %v1986 = vpack.c.b16 %v1975, %v1974
    %v1987 = vpack.c.b16 %v1977, %v1976
    %v1988 = vpack.c.b16 %v1979, %v1978
    %v1989 = vpack.c.b16 %v1981, %v1980
    %1998 = vmatpush.bf16.msra.mxu0 %v1989
    %1999 = vmatpush.bf16.msra.mxu0 %v1988
    %2000 = vmatpush.bf16.msra.mxu0 %v1987
    %2001 = vmatpush.bf16.msra.mxu0 %v1986
    %2002 = vmatpush.bf16.msra.mxu0 %v1985
    %2003 = vmatpush.bf16.msra.mxu0 %v1984
    %2004 = vmatpush.bf16.msra.mxu0 %v1983
    %2005 = vmatpush.bf16.msra.mxu0 %v1982
    %2006 = vmatmul.bf16.gmra.mxu0 %v1932
    %v2007 = vpop.f32.mrf.mxu0
    %v2008 = vadd.f32 %v150, %v2007
    %v2009 = vpop.f32.mrf.mxu0
    %v2010 = vadd.f32 %v150, %v2009
    %2011 = vdwg.mxu0
    %v2012 = vpack.c.bf16 %v2010, %v2008
    %s2013 = scalar_lea.vmem [#allocation10], 128
    %v2014 = vld [vmem:[%s2013] sm:$0xf]
    %v2015 = vld [vmem:[%s2013 + $0x4] sm:$0xf]
    %v2016 = vld [vmem:[%s2013 + $0x8] sm:$0xf]
    %v2017 = vld [vmem:[%s2013 + $0xc] sm:$0xf]
    %v2018 = vld [vmem:[%s2013 + $0x10] sm:$0xf]
    %v2019 = vld [vmem:[%s2013 + $0x14] sm:$0xf]
    %v2020 = vld [vmem:[%s2013 + $0x18] sm:$0xf]
    %v2021 = vld [vmem:[%s2013 + $0x1c] sm:$0xf]
    %v2022 = vld [vmem:[%s2013 + $0x20] sm:$0xf]
    %v2023 = vld [vmem:[%s2013 + $0x24] sm:$0xf]
    %v2024 = vld [vmem:[%s2013 + $0x28] sm:$0xf]
    %v2025 = vld [vmem:[%s2013 + $0x2c] sm:$0xf]
    %v2026 = vld [vmem:[%s2013 + $0x30] sm:$0xf]
    %v2027 = vld [vmem:[%s2013 + $0x34] sm:$0xf]
    %v2028 = vld [vmem:[%s2013 + $0x38] sm:$0xf]
    %v2029 = vld [vmem:[%s2013 + $0x3c] sm:$0xf]
    %v2046 = vunpack.c.l.b16 %v2014
    %v2047 = vunpack.c.l.b16 %v2015
    %v2048 = vunpack.c.l.b16 %v2016
    %v2049 = vunpack.c.l.b16 %v2017
    %v2050 = vunpack.c.l.b16 %v2018
    %v2051 = vunpack.c.l.b16 %v2019
    %v2052 = vunpack.c.l.b16 %v2020
    %v2053 = vunpack.c.l.b16 %v2021
    %v2054 = vunpack.c.l.b16 %v2022
    %v2055 = vunpack.c.l.b16 %v2023
    %v2056 = vunpack.c.l.b16 %v2024
    %v2057 = vunpack.c.l.b16 %v2025
    %v2058 = vunpack.c.l.b16 %v2026
    %v2059 = vunpack.c.l.b16 %v2027
    %v2060 = vunpack.c.l.b16 %v2028
    %v2061 = vunpack.c.l.b16 %v2029
    %v2062 = vpack.c.b16 %v2047, %v2046
    %v2063 = vpack.c.b16 %v2049, %v2048
    %v2064 = vpack.c.b16 %v2051, %v2050
    %v2065 = vpack.c.b16 %v2053, %v2052
    %v2066 = vpack.c.b16 %v2055, %v2054
    %v2067 = vpack.c.b16 %v2057, %v2056
    %v2068 = vpack.c.b16 %v2059, %v2058
    %v2069 = vpack.c.b16 %v2061, %v2060
    %2078 = vmatpush.bf16.msra.mxu0 %v2069
    %2079 = vmatpush.bf16.msra.mxu0 %v2068
    %2080 = vmatpush.bf16.msra.mxu0 %v2067
    %2081 = vmatpush.bf16.msra.mxu0 %v2066
    %2082 = vmatpush.bf16.msra.mxu0 %v2065
    %2083 = vmatpush.bf16.msra.mxu0 %v2064
    %2084 = vmatpush.bf16.msra.mxu0 %v2063
    %2085 = vmatpush.bf16.msra.mxu0 %v2062
    %2086 = vmatmul.bf16.gmra.mxu0 %v2012
    %v2087 = vpop.f32.mrf.mxu0
    %v2088 = vadd.f32 %v151, %v2087
    %v2089 = vpop.f32.mrf.mxu0
    %v2090 = vadd.f32 %v151, %v2089
    %2091 = vdwg.mxu0
    %2092 = vst [vmem:[%s11] sm:$0xff] %v2088
    %2093 = vst [vmem:[%s11 + $0x8] sm:$0xff] %v2090
    // Predicated region
    $region74: #{model2_forward.1} parent=1 // pred_check
      _
    $region75: #{model2_forward.1} parent=1 // pred_check_branch
      %2095 = sbr.rel (0) target = $region77
    $region76: #{model2_forward.1} parent=1 // pred_region
      _
    $region77: #{model2_forward.1} parent=1 // pred_fallthru
      _
    // Predicated region
    $region78: #{model2_forward.1} parent=1 // pred_check
      _
    $region79: #{model2_forward.1} parent=1 // pred_check_branch
      %2097 = sbr.rel (0) target = $region81
    $region80: #{model2_forward.1} parent=1 // pred_region
      _
    $region81: #{model2_forward.1} parent=1 // pred_fallthru
      _
    %2098 = vsyncpa [#allocation3], 1
    %2099 = vsyncpa [#allocation5], 1
    %2100 = vsyncpa [#allocation8], 1
    %2101 = vsyncpa [#allocation11], 1

</llo_original>
